<compile_context>
chip_gen: v7x
topology: tpu7x:2x2x1
jax: 0.10.0
libtpu: 0.0.40
codegen_flags: <defaults>
</compile_context>

<pallas_src>
import math
import functools

import jax
import jax.numpy as jnp
from jax import lax
from jax.experimental import pallas as pl
from jax.experimental.pallas import tpu as pltpu


# ----------------------------------------------------------------------------
# Fused Pallas kernel: full BertAttention stack + masked squared-error epilogue
# for one batch row.  grid = (batch, layer); layer is sequential ('arbitrary').
# ----------------------------------------------------------------------------
def _decoder_stack_kernel(x_ref, mrow_ref, mcol_ref, tgt_ref,
                          wqkv_ref, bqkv_ref, wo_ref, bo_ref, g_ref, beta_ref,
                          loss_ref, h_scr,
                          *, num_heads, head_dim, hidden):
    layer = pl.program_id(1)
    mmdt = wqkv_ref.dtype                       # matmul operand dtype (f32 or bf16)

    @pl.when(layer == 0)
    def _load_input():
        h_scr[...] = x_ref[0]                   # (S, H) activation resident in VMEM

    x = h_scr[...]                              # (S, H) f32

    # 0/1 pad-mask outer product built in-kernel (no (S, S) HBM traffic).
    m_row = mrow_ref[0]                         # (1, S)
    m_col = mcol_ref[0]                         # (S, 1)
    mask2d = m_col * m_row                      # (S, S); ADDED to scores, faithful
                                                # to the reference module semantics

    # Fused QKV projection: one (S, H) @ (H, 3H) MXU matmul, f32 accumulation.
    qkv = jnp.dot(x.astype(mmdt), wqkv_ref[0],
                  preferred_element_type=jnp.float32) + bqkv_ref[0]   # (S, 3H)

    wo = wo_ref[0]                              # (H, H) in mmdt
    scale = 1.0 / math.sqrt(head_dim)

    # Per-head attention; output projection accumulated per head against
    # row-slices of Wo -> no lane-axis concat of per-head contexts.
    attn = None
    for h in range(num_heads):
        lo = h * head_dim
        q_h = (qkv[:, lo:lo + head_dim] * scale).astype(mmdt)         # fold 1/sqrt(hd)
        k_h = qkv[:, hidden + lo:hidden + lo + head_dim].astype(mmdt)
        v_h = qkv[:, 2 * hidden + lo:2 * hidden + lo + head_dim].astype(mmdt)

        # QK^T via dot_general contraction on the last axes (no explicit .T copy).
        s = lax.dot_general(q_h, k_h, (((1,), (1,)), ((), ())),
                            preferred_element_type=jnp.float32) + mask2d   # (S, S)
        s = s - jnp.max(s, axis=-1, keepdims=True)
        p = jnp.exp(s)
        p = p * pl.reciprocal(jnp.sum(p, axis=-1, keepdims=True), approx=True)

        ctx_h = jnp.dot(p.astype(mmdt), v_h,
                        preferred_element_type=jnp.float32)            # (S, hd)
        part = jnp.dot(ctx_h.astype(mmdt), wo[lo:lo + head_dim, :],
                       preferred_element_type=jnp.float32)             # (S, H)
        attn = part if attn is None else attn + part

    attn_out = attn + bo_ref[0]

    # Residual + LayerNorm (single-pass mean / variance, eps = 1e-12).
    hres = attn_out + x
    inv_h = 1.0 / hidden
    mu = jnp.sum(hres, axis=-1, keepdims=True) * inv_h
    ex2 = jnp.sum(hres * hres, axis=-1, keepdims=True) * inv_h
    var = jnp.maximum(ex2 - mu * mu, 0.0)
    y = (hres - mu) * jax.lax.rsqrt(var + 1e-12)
    y = y * g_ref[0] + beta_ref[0]
    h_scr[...] = y

    # Masked squared-error epilogue fused into the last layer.
    @pl.when(layer == pl.num_programs(1) - 1)
    def _loss_epilogue():
        d = (y - tgt_ref[0]) * m_col                                   # (S, H)
        loss_ref[0] = jnp.sum(d * d, axis=0, keepdims=True)            # (1, H)


# ----------------------------------------------------------------------------
# Wrapper around the fused kernel.
# ----------------------------------------------------------------------------
def decoder_stack_loss(x, pad_mask, target, stacked, num_heads,
                       matmul_dtype=jnp.float32):
    """x, target: (B, S, H) f32; pad_mask: (B, S) f32 0/1; stacked: layer-stacked params."""
    B, S, H = x.shape
    L = stacked["wqkv"].shape[0]
    head_dim = H // num_heads

    kernel = functools.partial(_decoder_stack_kernel, num_heads=num_heads,
                               head_dim=head_dim, hidden=H)

    m_row = pad_mask.reshape(B, 1, S)
    m_col = pad_mask.reshape(B, S, 1)
    wqkv = stacked["wqkv"].astype(matmul_dtype)   # bf16 on v6e/v7x halves weight HBM/VMEM
    wo = stacked["wo"].astype(matmul_dtype)

    partial = pl.pallas_call(
        kernel,
        out_shape=jax.ShapeDtypeStruct((B, 1, H), jnp.float32),
        grid=(B, L),
        in_specs=[
            pl.BlockSpec((1, S, H), lambda b, l: (b, 0, 0)),        # x
            pl.BlockSpec((1, 1, S), lambda b, l: (b, 0, 0)),        # pad mask (row form)
            pl.BlockSpec((1, S, 1), lambda b, l: (b, 0, 0)),        # pad mask (col form)
            pl.BlockSpec((1, S, H), lambda b, l: (b, 0, 0)),        # target
            pl.BlockSpec((1, H, 3 * H), lambda b, l: (l, 0, 0)),    # fused Wqkv
            pl.BlockSpec((1, 1, 3 * H), lambda b, l: (l, 0, 0)),    # fused bqkv
            pl.BlockSpec((1, H, H), lambda b, l: (l, 0, 0)),        # Wo
            pl.BlockSpec((1, 1, H), lambda b, l: (l, 0, 0)),        # bo
            pl.BlockSpec((1, 1, H), lambda b, l: (l, 0, 0)),        # LN gamma
            pl.BlockSpec((1, 1, H), lambda b, l: (l, 0, 0)),        # LN beta
        ],
        out_specs=pl.BlockSpec((1, 1, H), lambda b, l: (b, 0, 0)),
        scratch_shapes=[pltpu.VMEM((S, H), jnp.float32)],
        compiler_params=pltpu.CompilerParams(
            dimension_semantics=("parallel", "arbitrary")),
    )(x, m_row, m_col, target, wqkv, stacked["bqkv"], wo,
      stacked["bo"], stacked["gamma"], stacked["beta"])

    # nn.MSELoss(reduction='mean') over the full (B, S, H) masked tensors.
    return jnp.sum(partial) / (B * S * H)


def stack_layer_params(params):
    """Stack per-layer params on a leading layer axis; fuse Q/K/V weights & biases."""
    wqkv = jnp.stack([jnp.concatenate([p["wq"], p["wk"], p["wv"]], axis=1)
                      for p in params])                             # (L, H, 3H)
    bqkv = jnp.stack([jnp.concatenate([p["bq"], p["bk"], p["bv"]])[None, :]
                      for p in params])                             # (L, 1, 3H)
    wo = jnp.stack([p["wo"] for p in params])                       # (L, H, H)
    bo = jnp.stack([p["bo"][None, :] for p in params])              # (L, 1, H)
    gamma = jnp.stack([p["gamma"][None, :] for p in params])        # (L, 1, H)
    beta = jnp.stack([p["beta"][None, :] for p in params])          # (L, 1, H)
    return dict(wqkv=wqkv, bqkv=bqkv, wo=wo, bo=bo, gamma=gamma, beta=beta)


# ----------------------------------------------------------------------------
# Full forward pass (tree padding / stacking glue in plain JAX, compute in Pallas).
# ----------------------------------------------------------------------------
def tree_to_seq_decoder_forward(tree, params, num_heads, matmul_dtype=jnp.float32):
    tree_feas = [level[0][0] for level in tree[::-1]]
    pad_mask = [level[0][1] for level in tree[::-1]]
    max_len = max(int(f.shape[1]) for f in tree_feas)
    dim = int(tree_feas[0].shape[2])
    for i in range(len(tree_feas)):
        if tree_feas[i].shape[1] < max_len:
            bz, length, dim = tree_feas[i].shape
            tree_feas[i] = jnp.concatenate(
                [tree_feas[i],
                 jnp.zeros((bz, max_len - length, dim), tree_feas[i].dtype)], axis=1)
            # faithful to reference: mask of level i is the padded mask of level i+1
            pad_mask[i] = jnp.concatenate(
                [pad_mask[i + 1],
                 jnp.zeros((bz, max_len - pad_mask[i + 1].shape[1]),
                           pad_mask[i + 1].dtype)], axis=1)

    tree_feas = jnp.stack(tree_feas, axis=1)          # (bz, levels, S, H)
    pad_mask = jnp.stack(pad_mask, axis=1)            # (bz, levels, S)

    input_feas = tree_feas[:, :-1].reshape(-1, max_len, dim)
    output_feas = tree_feas[:, 1:].reshape(-1, max_len, dim)
    seq_mask = pad_mask[:, :-1].reshape(-1, max_len)

    stacked = stack_layer_params(params)
    return decoder_stack_loss(input_feas, seq_mask, output_feas, stacked,
                              num_heads, matmul_dtype)


# ----------------------------------------------------------------------------
# Pure-JAX reference (faithful to the module semantics) for correctness check.
# ----------------------------------------------------------------------------
def _bert_attention_ref(x, mask2d, p, num_heads):
    B, S, H = x.shape
    hd = H // num_heads
    q = x @ p["wq"] + p["bq"]
    k = x @ p["wk"] + p["bk"]
    v = x @ p["wv"] + p["bv"]
    split = lambda t: t.reshape(B, S, num_heads, hd).transpose(0, 2, 1, 3)
    qh, kh, vh = split(q), split(k), split(v)
    scores = jnp.einsum("bhqd,bhkd->bhqk", qh, kh) / math.sqrt(hd) + mask2d[:, None]
    probs = jax.nn.softmax(scores, axis=-1)
    ctx = jnp.einsum("bhqk,bhkd->bhqd", probs, vh).transpose(0, 2, 1, 3).reshape(B, S, H)
    out = ctx @ p["wo"] + p["bo"]
    h = out + x
    mu = h.mean(-1, keepdims=True)
    var = ((h - mu) ** 2).mean(-1, keepdims=True)
    y = (h - mu) / jnp.sqrt(var + 1e-12)
    return y * p["gamma"] + p["beta"]


def _forward_ref(tree, params, num_heads):
    tree_feas = [level[0][0] for level in tree[::-1]]
    pad_mask = [level[0][1] for level in tree[::-1]]
    max_len = max(int(f.shape[1]) for f in tree_feas)
    dim = int(tree_feas[0].shape[2])
    for i in range(len(tree_feas)):
        if tree_feas[i].shape[1] < max_len:
            bz, length, dim = tree_feas[i].shape
            tree_feas[i] = jnp.concatenate(
                [tree_feas[i], jnp.zeros((bz, max_len - length, dim))], axis=1)
            pad_mask[i] = jnp.concatenate(
                [pad_mask[i + 1],
                 jnp.zeros((bz, max_len - pad_mask[i + 1].shape[1]))], axis=1)
    tree_feas = jnp.stack(tree_feas, axis=1)
    pad_mask = jnp.stack(pad_mask, axis=1)
    pad_attn = pad_mask[..., :, None] * pad_mask[..., None, :]
    input_feas = tree_feas[:, :-1].reshape(-1, max_len, dim)
    attn_mask = pad_attn[:, :-1].reshape(-1, max_len, max_len)
    output_feas = tree_feas[:, 1:].reshape(-1, max_len, dim)
    seq_mask = pad_mask[:, :-1].reshape(-1, max_len)[..., None]
    decoded = input_feas
    for p in params:
        decoded = _bert_attention_ref(decoded, attn_mask, p, num_heads)
    return jnp.mean((decoded * seq_mask - output_feas * seq_mask) ** 2)


# ----------------------------------------------------------------------------
def init_params(key, hidden, stack_num):
    params = []
    for _ in range(stack_num):
        key, *ks = jax.random.split(key, 9)
        w = lambda k: 0.02 * jax.random.normal(k, (hidden, hidden), jnp.float32)
        b = lambda k: 0.02 * jax.random.normal(k, (hidden,), jnp.float32)
        params.append(dict(
            wq=w(ks[0]), bq=b(ks[1]),
            wk=w(ks[2]), bk=b(ks[3]),
            wv=w(ks[4]), bv=b(ks[5]),
            wo=w(ks[6]), bo=b(ks[7]),
            gamma=jnp.ones((hidden,), jnp.float32),
            beta=jnp.zeros((hidden,), jnp.float32),
        ))
    return params


if __name__ == "__main__":
    key = jax.random.PRNGKey(0)

    bz = 2          # batch
    hidden = 32     # hidden size (small stand-in for 768)
    num_heads = 4   # head_dim = 8
    stack_num = 3
    level_lengths = [8, 4, 2]            # first (original) level is the longest
    valid_lens = [[7, 5], [4, 3], [2, 1]]

    tree = []
    for Lv, valid in zip(level_lengths, valid_lens):
        key, kf = jax.random.split(key)
        feas = jax.random.normal(kf, (bz, Lv, hidden), jnp.float32)
        mask = (jnp.arange(Lv)[None, :] < jnp.asarray(valid)[:, None]).astype(jnp.float32)
        tree.append([(feas, mask)])

    key, kp = jax.random.split(key)
    params = init_params(kp, hidden, stack_num)

    loss_ref = jax.block_until_ready(_forward_ref(tree, params, num_heads))

    # f32 MXU operand path
    loss_f32 = jax.block_until_ready(
        tree_to_seq_decoder_forward(tree, params, num_heads, jnp.float32))
    assert jnp.allclose(loss_f32, loss_ref, rtol=5e-3, atol=1e-4), (loss_f32, loss_ref)

    # bf16 MXU operand path (v6e/v7x recommendation); looser tolerance.
    loss_bf16 = jax.block_until_ready(
        tree_to_seq_decoder_forward(tree, params, num_heads, jnp.bfloat16))
    assert jnp.allclose(loss_bf16, loss_ref, rtol=1e-1, atol=1e-2), (loss_bf16, loss_ref)

    print("KERNEL_OK")
</pallas_src>

<mosaic_0001>
module attributes {stable_mosaic.version = 11 : i64} {
  func.func @_decoder_stack_kernel(%arg0: i32, %arg1: i32, %arg2: memref<1x8x32xf32, #tpu.memory_space<vmem>>, %arg3: memref<1x1x8xf32, #tpu.memory_space<vmem>>, %arg4: memref<1x8x1xf32, #tpu.memory_space<vmem>>, %arg5: memref<1x8x32xf32, #tpu.memory_space<vmem>>, %arg6: memref<1x32x96xf32, #tpu.memory_space<vmem>>, %arg7: memref<1x1x96xf32, #tpu.memory_space<vmem>>, %arg8: memref<1x32x32xf32, #tpu.memory_space<vmem>>, %arg9: memref<1x1x32xf32, #tpu.memory_space<vmem>>, %arg10: memref<1x1x32xf32, #tpu.memory_space<vmem>>, %arg11: memref<1x1x32xf32, #tpu.memory_space<vmem>>, %arg12: memref<1x1x32xf32, #tpu.memory_space<vmem>>, %arg13: memref<8x32xf32, #tpu.memory_space<vmem>>) attributes {dimension_semantics = [#tpu.dimension_semantics<parallel>, #tpu.dimension_semantics<arbitrary>], iteration_bounds = array<i64: 4, 3>, scalar_prefetch = 0 : i64, scratch_operands = 1 : i64, tpu.core_type = #tpu.core_type<tc>, window_params = [{transform_indices = @transform_0, window_bounds = array<i64: 1, 8, 32>}, {transform_indices = @transform_1, window_bounds = array<i64: 1, 1, 8>}, {transform_indices = @transform_2, window_bounds = array<i64: 1, 8, 1>}, {transform_indices = @transform_3, window_bounds = array<i64: 1, 8, 32>}, {transform_indices = @transform_4, window_bounds = array<i64: 1, 32, 96>}, {transform_indices = @transform_5, window_bounds = array<i64: 1, 1, 96>}, {transform_indices = @transform_6, window_bounds = array<i64: 1, 32, 32>}, {transform_indices = @transform_7, window_bounds = array<i64: 1, 1, 32>}, {transform_indices = @transform_8, window_bounds = array<i64: 1, 1, 32>}, {transform_indices = @transform_9, window_bounds = array<i64: 1, 1, 32>}, {transform_indices = @transform_10, window_bounds = array<i64: 1, 1, 32>}]} {
    %c0_i32 = arith.constant 0 : i32
    %0 = arith.cmpi eq, %arg1, %c0_i32 : i32
    %1 = arith.extui %0 : i1 to i32
    %c0_i32_0 = arith.constant 0 : i32
    %2 = arith.cmpi ne, %1, %c0_i32_0 : i32
    scf.if %2 {
      %c0_59 = arith.constant 0 : index
      %c0_60 = arith.constant 0 : index
      %c0_61 = arith.constant 0 : index
      %140 = vector.load %arg2[%c0_59, %c0_60, %c0_61] : memref<1x8x32xf32, #tpu.memory_space<vmem>>, vector<1x8x32xf32>
      %141 = vector.shape_cast %140 : vector<1x8x32xf32> to vector<8x32xf32>
      %c0_62 = arith.constant 0 : index
      %c0_63 = arith.constant 0 : index
      %142 = vector.load %arg13[%c0_62, %c0_63] : memref<8x32xf32, #tpu.memory_space<vmem>>, vector<8x32xf32>
      tpu.vector_store %arg13[%c0_62, %c0_63], %141 {strides = array<i32>} : memref<8x32xf32, #tpu.memory_space<vmem>>, vector<8x32xf32>,
    } else {
    }
    %c0 = arith.constant 0 : index
    %c0_1 = arith.constant 0 : index
    %3 = vector.load %arg13[%c0, %c0_1] : memref<8x32xf32, #tpu.memory_space<vmem>>, vector<8x32xf32>
    %c0_2 = arith.constant 0 : index
    %c0_3 = arith.constant 0 : index
    %c0_4 = arith.constant 0 : index
    %4 = vector.load %arg3[%c0_2, %c0_3, %c0_4] : memref<1x1x8xf32, #tpu.memory_space<vmem>>, vector<1x1x8xf32>
    %5 = vector.shape_cast %4 : vector<1x1x8xf32> to vector<1x8xf32>
    %c0_5 = arith.constant 0 : index
    %c0_6 = arith.constant 0 : index
    %c0_7 = arith.constant 0 : index
    %6 = vector.load %arg4[%c0_5, %c0_6, %c0_7] : memref<1x8x1xf32, #tpu.memory_space<vmem>>, vector<1x8x1xf32>
    %7 = vector.shape_cast %6 : vector<1x8x1xf32> to vector<8x1xf32>
    %8 = vector.broadcast %7 : vector<8x1xf32> to vector<8x8xf32>
    %9 = vector.broadcast %5 : vector<1x8xf32> to vector<8x8xf32>
    %10 = arith.mulf %8, %9 : vector<8x8xf32>
    %c0_8 = arith.constant 0 : index
    %c0_9 = arith.constant 0 : index
    %c0_10 = arith.constant 0 : index
    %11 = vector.load %arg6[%c0_8, %c0_9, %c0_10] : memref<1x32x96xf32, #tpu.memory_space<vmem>>, vector<1x32x96xf32>
    %12 = vector.shape_cast %11 : vector<1x32x96xf32> to vector<32x96xf32>
    %cst = arith.constant dense<0.000000e+00> : vector<8x96xf32>
    %13 = tpu.matmul %3, %12, %cst {dimension_numbers = #tpu.dot_dimension_numbers<[1], [0], [0], [1], [0, 0, 1, 1], [], []>} : vector<8x32xf32>, vector<32x96xf32>, vector<8x96xf32> -> vector<8x96xf32>
    %c0_11 = arith.constant 0 : index
    %c0_12 = arith.constant 0 : index
    %c0_13 = arith.constant 0 : index
    %14 = vector.load %arg7[%c0_11, %c0_12, %c0_13] : memref<1x1x96xf32, #tpu.memory_space<vmem>>, vector<1x1x96xf32>
    %15 = vector.shape_cast %14 : vector<1x1x96xf32> to vector<1x96xf32>
    %16 = vector.broadcast %15 : vector<1x96xf32> to vector<8x96xf32>
    %17 = arith.addf %13, %16 : vector<8x96xf32>
    %c0_14 = arith.constant 0 : index
    %c0_15 = arith.constant 0 : index
    %c0_16 = arith.constant 0 : index
    %18 = vector.load %arg8[%c0_14, %c0_15, %c0_16] : memref<1x32x32xf32, #tpu.memory_space<vmem>>, vector<1x32x32xf32>
    %19 = vector.shape_cast %18 : vector<1x32x32xf32> to vector<32x32xf32>
    %20 = vector.extract_strided_slice %17 {offsets = [0, 0], sizes = [8, 8], strides = [1, 1]} : vector<8x96xf32> to vector<8x8xf32>
    %cst_17 = arith.constant 0.353553385 : f32
    %21 = vector.broadcast %cst_17 : f32 to vector<8x8xf32>
    %22 = arith.mulf %20, %21 : vector<8x8xf32>
    %23 = vector.extract_strided_slice %17 {offsets = [0, 32], sizes = [8, 8], strides = [1, 1]} : vector<8x96xf32> to vector<8x8xf32>
    %24 = vector.extract_strided_slice %17 {offsets = [0, 64], sizes = [8, 8], strides = [1, 1]} : vector<8x96xf32> to vector<8x8xf32>
    %cst_18 = arith.constant dense<0.000000e+00> : vector<8x8xf32>
    %25 = tpu.matmul %22, %23, %cst_18 {dimension_numbers = #tpu.dot_dimension_numbers<[1], [1], [0], [0], [0, 0, 1, 0], [], []>} : vector<8x8xf32>, vector<8x8xf32>, vector<8x8xf32> -> vector<8x8xf32>
    %26 = arith.addf %25, %10 : vector<8x8xf32>
    %cst_19 = arith.constant dense<0xFF800000> : vector<8xf32>
    %27 = vector.multi_reduction <maximumf>, %26, %cst_19 [1] : vector<8x8xf32> to vector<8xf32>
    %28 = vector.shape_cast %27 : vector<8xf32> to vector<8x1xf32>
    %29 = vector.broadcast %28 : vector<8x1xf32> to vector<8x8xf32>
    %30 = arith.subf %26, %29 : vector<8x8xf32>
    %31 = math.exp %30 : vector<8x8xf32>
    %cst_20 = arith.constant dense<0.000000e+00> : vector<8xf32>
    %32 = vector.multi_reduction <add>, %31, %cst_20 [1] : vector<8x8xf32> to vector<8xf32>
    %33 = vector.shape_cast %32 : vector<8xf32> to vector<8x1xf32>
    %34 = tpu.reciprocal %33 {approx = true} : vector<8x1xf32> -> vector<8x1xf32>
    %35 = vector.broadcast %34 : vector<8x1xf32> to vector<8x8xf32>
    %36 = arith.mulf %31, %35 : vector<8x8xf32>
    %cst_21 = arith.constant dense<0.000000e+00> : vector<8x8xf32>
    %37 = tpu.matmul %36, %24, %cst_21 {dimension_numbers = #tpu.dot_dimension_numbers<[1], [0], [0], [1], [0, 0, 1, 1], [], []>} : vector<8x8xf32>, vector<8x8xf32>, vector<8x8xf32> -> vector<8x8xf32>
    %38 = vector.extract_strided_slice %19 {offsets = [0, 0], sizes = [8, 32], strides = [1, 1]} : vector<32x32xf32> to vector<8x32xf32>
    %cst_22 = arith.constant dense<0.000000e+00> : vector<8x32xf32>
    %39 = tpu.matmul %37, %38, %cst_22 {dimension_numbers = #tpu.dot_dimension_numbers<[1], [0], [0], [1], [0, 0, 1, 1], [], []>} : vector<8x8xf32>, vector<8x32xf32>, vector<8x32xf32> -> vector<8x32xf32>
    %40 = vector.extract_strided_slice %17 {offsets = [0, 8], sizes = [8, 8], strides = [1, 1]} : vector<8x96xf32> to vector<8x8xf32>
    %cst_23 = arith.constant 0.353553385 : f32
    %41 = vector.broadcast %cst_23 : f32 to vector<8x8xf32>
    %42 = arith.mulf %40, %41 : vector<8x8xf32>
    %43 = vector.extract_strided_slice %17 {offsets = [0, 40], sizes = [8, 8], strides = [1, 1]} : vector<8x96xf32> to vector<8x8xf32>
    %44 = vector.extract_strided_slice %17 {offsets = [0, 72], sizes = [8, 8], strides = [1, 1]} : vector<8x96xf32> to vector<8x8xf32>
    %cst_24 = arith.constant dense<0.000000e+00> : vector<8x8xf32>
    %45 = tpu.matmul %42, %43, %cst_24 {dimension_numbers = #tpu.dot_dimension_numbers<[1], [1], [0], [0], [0, 0, 1, 0], [], []>} : vector<8x8xf32>, vector<8x8xf32>, vector<8x8xf32> -> vector<8x8xf32>
    %46 = arith.addf %45, %10 : vector<8x8xf32>
    %cst_25 = arith.constant dense<0xFF800000> : vector<8xf32>
    %47 = vector.multi_reduction <maximumf>, %46, %cst_25 [1] : vector<8x8xf32> to vector<8xf32>
    %48 = vector.shape_cast %47 : vector<8xf32> to vector<8x1xf32>
    %49 = vector.broadcast %48 : vector<8x1xf32> to vector<8x8xf32>
    %50 = arith.subf %46, %49 : vector<8x8xf32>
    %51 = math.exp %50 : vector<8x8xf32>
    %cst_26 = arith.constant dense<0.000000e+00> : vector<8xf32>
    %52 = vector.multi_reduction <add>, %51, %cst_26 [1] : vector<8x8xf32> to vector<8xf32>
    %53 = vector.shape_cast %52 : vector<8xf32> to vector<8x1xf32>
    %54 = tpu.reciprocal %53 {approx = true} : vector<8x1xf32> -> vector<8x1xf32>
    %55 = vector.broadcast %54 : vector<8x1xf32> to vector<8x8xf32>
    %56 = arith.mulf %51, %55 : vector<8x8xf32>
    %cst_27 = arith.constant dense<0.000000e+00> : vector<8x8xf32>
    %57 = tpu.matmul %56, %44, %cst_27 {dimension_numbers = #tpu.dot_dimension_numbers<[1], [0], [0], [1], [0, 0, 1, 1], [], []>} : vector<8x8xf32>, vector<8x8xf32>, vector<8x8xf32> -> vector<8x8xf32>
    %58 = vector.extract_strided_slice %19 {offsets = [8, 0], sizes = [8, 32], strides = [1, 1]} : vector<32x32xf32> to vector<8x32xf32>
    %cst_28 = arith.constant dense<0.000000e+00> : vector<8x32xf32>
    %59 = tpu.matmul %57, %58, %cst_28 {dimension_numbers = #tpu.dot_dimension_numbers<[1], [0], [0], [1], [0, 0, 1, 1], [], []>} : vector<8x8xf32>, vector<8x32xf32>, vector<8x32xf32> -> vector<8x32xf32>
    %60 = arith.addf %39, %59 : vector<8x32xf32>
    %61 = vector.extract_strided_slice %17 {offsets = [0, 16], sizes = [8, 8], strides = [1, 1]} : vector<8x96xf32> to vector<8x8xf32>
    %cst_29 = arith.constant 0.353553385 : f32
    %62 = vector.broadcast %cst_29 : f32 to vector<8x8xf32>
    %63 = arith.mulf %61, %62 : vector<8x8xf32>
    %64 = vector.extract_strided_slice %17 {offsets = [0, 48], sizes = [8, 8], strides = [1, 1]} : vector<8x96xf32> to vector<8x8xf32>
    %65 = vector.extract_strided_slice %17 {offsets = [0, 80], sizes = [8, 8], strides = [1, 1]} : vector<8x96xf32> to vector<8x8xf32>
    %cst_30 = arith.constant dense<0.000000e+00> : vector<8x8xf32>
    %66 = tpu.matmul %63, %64, %cst_30 {dimension_numbers = #tpu.dot_dimension_numbers<[1], [1], [0], [0], [0, 0, 1, 0], [], []>} : vector<8x8xf32>, vector<8x8xf32>, vector<8x8xf32> -> vector<8x8xf32>
    %67 = arith.addf %66, %10 : vector<8x8xf32>
    %cst_31 = arith.constant dense<0xFF800000> : vector<8xf32>
    %68 = vector.multi_reduction <maximumf>, %67, %cst_31 [1] : vector<8x8xf32> to vector<8xf32>
    %69 = vector.shape_cast %68 : vector<8xf32> to vector<8x1xf32>
    %70 = vector.broadcast %69 : vector<8x1xf32> to vector<8x8xf32>
    %71 = arith.subf %67, %70 : vector<8x8xf32>
    %72 = math.exp %71 : vector<8x8xf32>
    %cst_32 = arith.constant dense<0.000000e+00> : vector<8xf32>
    %73 = vector.multi_reduction <add>, %72, %cst_32 [1] : vector<8x8xf32> to vector<8xf32>
    %74 = vector.shape_cast %73 : vector<8xf32> to vector<8x1xf32>
    %75 = tpu.reciprocal %74 {approx = true} : vector<8x1xf32> -> vector<8x1xf32>
    %76 = vector.broadcast %75 : vector<8x1xf32> to vector<8x8xf32>
    %77 = arith.mulf %72, %76 : vector<8x8xf32>
    %cst_33 = arith.constant dense<0.000000e+00> : vector<8x8xf32>
    %78 = tpu.matmul %77, %65, %cst_33 {dimension_numbers = #tpu.dot_dimension_numbers<[1], [0], [0], [1], [0, 0, 1, 1], [], []>} : vector<8x8xf32>, vector<8x8xf32>, vector<8x8xf32> -> vector<8x8xf32>
    %79 = vector.extract_strided_slice %19 {offsets = [16, 0], sizes = [8, 32], strides = [1, 1]} : vector<32x32xf32> to vector<8x32xf32>
    %cst_34 = arith.constant dense<0.000000e+00> : vector<8x32xf32>
    %80 = tpu.matmul %78, %79, %cst_34 {dimension_numbers = #tpu.dot_dimension_numbers<[1], [0], [0], [1], [0, 0, 1, 1], [], []>} : vector<8x8xf32>, vector<8x32xf32>, vector<8x32xf32> -> vector<8x32xf32>
    %81 = arith.addf %60, %80 : vector<8x32xf32>
    %82 = vector.extract_strided_slice %17 {offsets = [0, 24], sizes = [8, 8], strides = [1, 1]} : vector<8x96xf32> to vector<8x8xf32>
    %cst_35 = arith.constant 0.353553385 : f32
    %83 = vector.broadcast %cst_35 : f32 to vector<8x8xf32>
    %84 = arith.mulf %82, %83 : vector<8x8xf32>
    %85 = vector.extract_strided_slice %17 {offsets = [0, 56], sizes = [8, 8], strides = [1, 1]} : vector<8x96xf32> to vector<8x8xf32>
    %86 = vector.extract_strided_slice %17 {offsets = [0, 88], sizes = [8, 8], strides = [1, 1]} : vector<8x96xf32> to vector<8x8xf32>
    %cst_36 = arith.constant dense<0.000000e+00> : vector<8x8xf32>
    %87 = tpu.matmul %84, %85, %cst_36 {dimension_numbers = #tpu.dot_dimension_numbers<[1], [1], [0], [0], [0, 0, 1, 0], [], []>} : vector<8x8xf32>, vector<8x8xf32>, vector<8x8xf32> -> vector<8x8xf32>
    %88 = arith.addf %87, %10 : vector<8x8xf32>
    %cst_37 = arith.constant dense<0xFF800000> : vector<8xf32>
    %89 = vector.multi_reduction <maximumf>, %88, %cst_37 [1] : vector<8x8xf32> to vector<8xf32>
    %90 = vector.shape_cast %89 : vector<8xf32> to vector<8x1xf32>
    %91 = vector.broadcast %90 : vector<8x1xf32> to vector<8x8xf32>
    %92 = arith.subf %88, %91 : vector<8x8xf32>
    %93 = math.exp %92 : vector<8x8xf32>
    %cst_38 = arith.constant dense<0.000000e+00> : vector<8xf32>
    %94 = vector.multi_reduction <add>, %93, %cst_38 [1] : vector<8x8xf32> to vector<8xf32>
    %95 = vector.shape_cast %94 : vector<8xf32> to vector<8x1xf32>
    %96 = tpu.reciprocal %95 {approx = true} : vector<8x1xf32> -> vector<8x1xf32>
    %97 = vector.broadcast %96 : vector<8x1xf32> to vector<8x8xf32>
    %98 = arith.mulf %93, %97 : vector<8x8xf32>
    %cst_39 = arith.constant dense<0.000000e+00> : vector<8x8xf32>
    %99 = tpu.matmul %98, %86, %cst_39 {dimension_numbers = #tpu.dot_dimension_numbers<[1], [0], [0], [1], [0, 0, 1, 1], [], []>} : vector<8x8xf32>, vector<8x8xf32>, vector<8x8xf32> -> vector<8x8xf32>
    %100 = vector.extract_strided_slice %19 {offsets = [24, 0], sizes = [8, 32], strides = [1, 1]} : vector<32x32xf32> to vector<8x32xf32>
    %cst_40 = arith.constant dense<0.000000e+00> : vector<8x32xf32>
    %101 = tpu.matmul %99, %100, %cst_40 {dimension_numbers = #tpu.dot_dimension_numbers<[1], [0], [0], [1], [0, 0, 1, 1], [], []>} : vector<8x8xf32>, vector<8x32xf32>, vector<8x32xf32> -> vector<8x32xf32>
    %102 = arith.addf %81, %101 : vector<8x32xf32>
    %c0_41 = arith.constant 0 : index
    %c0_42 = arith.constant 0 : index
    %c0_43 = arith.constant 0 : index
    %103 = vector.load %arg9[%c0_41, %c0_42, %c0_43] : memref<1x1x32xf32, #tpu.memory_space<vmem>>, vector<1x1x32xf32>
    %104 = vector.shape_cast %103 : vector<1x1x32xf32> to vector<1x32xf32>
    %105 = vector.broadcast %104 : vector<1x32xf32> to vector<8x32xf32>
    %106 = arith.addf %102, %105 : vector<8x32xf32>
    %107 = arith.addf %106, %3 : vector<8x32xf32>
    %cst_44 = arith.constant dense<0.000000e+00> : vector<8xf32>
    %108 = vector.multi_reduction <add>, %107, %cst_44 [1] : vector<8x32xf32> to vector<8xf32>
    %109 = vector.shape_cast %108 : vector<8xf32> to vector<8x1xf32>
    %cst_45 = arith.constant 3.125000e-02 : f32
    %110 = vector.broadcast %cst_45 : f32 to vector<8x1xf32>
    %111 = arith.mulf %109, %110 : vector<8x1xf32>
    %112 = arith.mulf %107, %107 : vector<8x32xf32>
    %cst_46 = arith.constant dense<0.000000e+00> : vector<8xf32>
    %113 = vector.multi_reduction <add>, %112, %cst_46 [1] : vector<8x32xf32> to vector<8xf32>
    %114 = vector.shape_cast %113 : vector<8xf32> to vector<8x1xf32>
    %cst_47 = arith.constant 3.125000e-02 : f32
    %115 = vector.broadcast %cst_47 : f32 to vector<8x1xf32>
    %116 = arith.mulf %114, %115 : vector<8x1xf32>
    %117 = arith.mulf %111, %111 : vector<8x1xf32>
    %118 = arith.subf %116, %117 : vector<8x1xf32>
    %cst_48 = arith.constant 0.000000e+00 : f32
    %119 = vector.broadcast %cst_48 : f32 to vector<8x1xf32>
    %120 = arith.maximumf %118, %119 : vector<8x1xf32>
    %121 = vector.broadcast %111 : vector<8x1xf32> to vector<8x32xf32>
    %122 = arith.subf %107, %121 : vector<8x32xf32>
    %cst_49 = arith.constant 9.99999996E-13 : f32
    %123 = vector.broadcast %cst_49 : f32 to vector<8x1xf32>
    %124 = arith.addf %120, %123 : vector<8x1xf32>
    %125 = math.rsqrt %124 : vector<8x1xf32>
    %126 = vector.broadcast %125 : vector<8x1xf32> to vector<8x32xf32>
    %127 = arith.mulf %122, %126 : vector<8x32xf32>
    %c0_50 = arith.constant 0 : index
    %c0_51 = arith.constant 0 : index
    %c0_52 = arith.constant 0 : index
    %128 = vector.load %arg10[%c0_50, %c0_51, %c0_52] : memref<1x1x32xf32, #tpu.memory_space<vmem>>, vector<1x1x32xf32>
    %129 = vector.shape_cast %128 : vector<1x1x32xf32> to vector<1x32xf32>
    %130 = vector.broadcast %129 : vector<1x32xf32> to vector<8x32xf32>
    %131 = arith.mulf %127, %130 : vector<8x32xf32>
    %c0_53 = arith.constant 0 : index
    %c0_54 = arith.constant 0 : index
    %c0_55 = arith.constant 0 : index
    %132 = vector.load %arg11[%c0_53, %c0_54, %c0_55] : memref<1x1x32xf32, #tpu.memory_space<vmem>>, vector<1x1x32xf32>
    %133 = vector.shape_cast %132 : vector<1x1x32xf32> to vector<1x32xf32>
    %134 = vector.broadcast %133 : vector<1x32xf32> to vector<8x32xf32>
    %135 = arith.addf %131, %134 : vector<8x32xf32>
    %c0_56 = arith.constant 0 : index
    %c0_57 = arith.constant 0 : index
    %136 = vector.load %arg13[%c0_56, %c0_57] : memref<8x32xf32, #tpu.memory_space<vmem>>, vector<8x32xf32>
    tpu.vector_store %arg13[%c0_56, %c0_57], %135 {strides = array<i32>} : memref<8x32xf32, #tpu.memory_space<vmem>>, vector<8x32xf32>,
    %c2_i32 = arith.constant 2 : i32
    %137 = arith.cmpi eq, %arg1, %c2_i32 : i32
    %138 = arith.extui %137 : i1 to i32
    %c0_i32_58 = arith.constant 0 : i32
    %139 = arith.cmpi ne, %138, %c0_i32_58 : i32
    scf.if %139 {
      %c0_59 = arith.constant 0 : index
      %c0_60 = arith.constant 0 : index
      %c0_61 = arith.constant 0 : index
      %140 = vector.load %arg5[%c0_59, %c0_60, %c0_61] : memref<1x8x32xf32, #tpu.memory_space<vmem>>, vector<1x8x32xf32>
      %141 = vector.shape_cast %140 : vector<1x8x32xf32> to vector<8x32xf32>
      %142 = arith.subf %135, %141 : vector<8x32xf32>
      %143 = vector.broadcast %7 : vector<8x1xf32> to vector<8x32xf32>
      %144 = arith.mulf %142, %143 : vector<8x32xf32>
      %145 = arith.mulf %144, %144 : vector<8x32xf32>
      %cst_62 = arith.constant dense<0.000000e+00> : vector<32xf32>
      %146 = vector.multi_reduction <add>, %145, %cst_62 [0] : vector<8x32xf32> to vector<32xf32>
      %147 = vector.shape_cast %146 : vector<32xf32> to vector<1x32xf32>
      %c0_63 = arith.constant 0 : index
      %c0_64 = arith.constant 0 : index
      %c0_65 = arith.constant 0 : index
      %148 = vector.load %arg12[%c0_63, %c0_64, %c0_65] : memref<1x1x32xf32, #tpu.memory_space<vmem>>, vector<1x1x32xf32>
      %149 = vector.shape_cast %148 : vector<1x1x32xf32> to vector<1x32xf32>
      %150 = vector.shape_cast %147 : vector<1x32xf32> to vector<1x1x32xf32>
      tpu.vector_store %arg12[%c0_63, %c0_64, %c0_65], %150 {strides = array<i32>} : memref<1x1x32xf32, #tpu.memory_space<vmem>>, vector<1x1x32xf32>,
    } else {
    }
    return
  }
  func.func @transform_0(%arg0: i32, %arg1: i32) -> (i32, i32, i32) {
    %c0_i32 = arith.constant 0 : i32
    %c0_i32_0 = arith.constant 0 : i32
    %c0_i32_1 = arith.constant 0 : i32
    return %arg0, %c0_i32, %c0_i32_0 : i32, i32, i32
  }
  func.func @transform_1(%arg0: i32, %arg1: i32) -> (i32, i32, i32) {
    %c0_i32 = arith.constant 0 : i32
    %c0_i32_0 = arith.constant 0 : i32
    %c0_i32_1 = arith.constant 0 : i32
    return %arg0, %c0_i32, %c0_i32_0 : i32, i32, i32
  }
  func.func @transform_2(%arg0: i32, %arg1: i32) -> (i32, i32, i32) {
    %c0_i32 = arith.constant 0 : i32
    %c0_i32_0 = arith.constant 0 : i32
    %c0_i32_1 = arith.constant 0 : i32
    return %arg0, %c0_i32, %c0_i32_0 : i32, i32, i32
  }
  func.func @transform_3(%arg0: i32, %arg1: i32) -> (i32, i32, i32) {
    %c0_i32 = arith.constant 0 : i32
    %c0_i32_0 = arith.constant 0 : i32
    %c0_i32_1 = arith.constant 0 : i32
    return %arg0, %c0_i32, %c0_i32_0 : i32, i32, i32
  }
  func.func @transform_4(%arg0: i32, %arg1: i32) -> (i32, i32, i32) {
    %c0_i32 = arith.constant 0 : i32
    %c0_i32_0 = arith.constant 0 : i32
    %c0_i32_1 = arith.constant 0 : i32
    return %arg1, %c0_i32, %c0_i32_0 : i32, i32, i32
  }
  func.func @transform_5(%arg0: i32, %arg1: i32) -> (i32, i32, i32) {
    %c0_i32 = arith.constant 0 : i32
    %c0_i32_0 = arith.constant 0 : i32
    %c0_i32_1 = arith.constant 0 : i32
    return %arg1, %c0_i32, %c0_i32_0 : i32, i32, i32
  }
  func.func @transform_6(%arg0: i32, %arg1: i32) -> (i32, i32, i32) {
    %c0_i32 = arith.constant 0 : i32
    %c0_i32_0 = arith.constant 0 : i32
    %c0_i32_1 = arith.constant 0 : i32
    return %arg1, %c0_i32, %c0_i32_0 : i32, i32, i32
  }
  func.func @transform_7(%arg0: i32, %arg1: i32) -> (i32, i32, i32) {
    %c0_i32 = arith.constant 0 : i32
    %c0_i32_0 = arith.constant 0 : i32
    %c0_i32_1 = arith.constant 0 : i32
    return %arg1, %c0_i32, %c0_i32_0 : i32, i32, i32
  }
  func.func @transform_8(%arg0: i32, %arg1: i32) -> (i32, i32, i32) {
    %c0_i32 = arith.constant 0 : i32
    %c0_i32_0 = arith.constant 0 : i32
    %c0_i32_1 = arith.constant 0 : i32
    return %arg1, %c0_i32, %c0_i32_0 : i32, i32, i32
  }
  func.func @transform_9(%arg0: i32, %arg1: i32) -> (i32, i32, i32) {
    %c0_i32 = arith.constant 0 : i32
    %c0_i32_0 = arith.constant 0 : i32
    %c0_i32_1 = arith.constant 0 : i32
    return %arg1, %c0_i32, %c0_i32_0 : i32, i32, i32
  }
  func.func @transform_10(%arg0: i32, %arg1: i32) -> (i32, i32, i32) {
    %c0_i32 = arith.constant 0 : i32
    %c0_i32_0 = arith.constant 0 : i32
    %c0_i32_1 = arith.constant 0 : i32
    return %arg0, %c0_i32, %c0_i32_0 : i32, i32, i32
  }
}

</mosaic_0001>

<llo_original>
// kernel: tpu_custom_call.1
$region0: #{tpu_custom_call.1}
  #allocation0 [shape = 'u32[]', space=smem, size = 0x4, offset = 0x4, fixed_abs, tag = 'smem constant byte address 0x4 - core index']
  #allocation1 [shape = 'u32[144,128]{1,0:T(1,128)}', space=vmem, size = 0x12000, scoped, tag = 'internal scratch']
  #allocation2 [shape = 'f32[8,32]{1,0:T(8,128)}', space=vmem, size = 0x1000, scoped, tag = 'scratch operand']
  %s0 = inlined_call_operand.vmem [shape: f32[4,8,32], index: 0, kind: input, shape index: {}]
  %s1 = inlined_call_operand.vmem [shape: f32[4,1,8], index: 1, kind: input, shape index: {}]
  %s2 = inlined_call_operand.vmem [shape: f32[4,8,1], index: 2, kind: input, shape index: {}]
  %s3 = inlined_call_operand.hbm [shape: f32[4,8,32], index: 3, kind: input, shape index: {}]
  %s4 = inlined_call_operand.hbm [shape: f32[3,32,96], index: 4, kind: input, shape index: {}]
  %s5 = inlined_call_operand.vmem [shape: f32[3,1,96], index: 5, kind: input, shape index: {}]
  %s6 = inlined_call_operand.hbm [shape: f32[3,32,32], index: 6, kind: input, shape index: {}]
  %s7 = inlined_call_operand.vmem [shape: f32[3,1,32], index: 7, kind: input, shape index: {}]
  %s8 = inlined_call_operand.vmem [shape: f32[3,1,32], index: 8, kind: input, shape index: {}]
  %s9 = inlined_call_operand.vmem [shape: f32[3,1,32], index: 9, kind: input, shape index: {}]
  %s10 = inlined_call_operand.hbm [shape: f32[4,1,32], index: 10, kind: output, shape index: {}]
  %s11 = sld [smem:[#allocation0]]
  $region93: #{tpu_custom_call.1} parent=0
    _
  %s13 = ssub.s32 1, %s11
  %s14 = scalar_select 0, %s13, %s11
  $region1: #{tpu_custom_call.1} parent=0
    #allocation3 [shape = 'u8[8192]{0}', space=vmem, size = 0x2000, scoped, tag = 'input window, operand 3']
    #allocation4 [shape = 's32[2]{0}', space=sflag, size = 0x8, scoped, tag = 'scoped memory for tpu_custom_call.1']
    #allocation5 [shape = 's32[2]{0}', space=sflag, size = 0x8, scoped, tag = 'scoped memory for tpu_custom_call.1']
    #allocation6 [shape = 'u8[32768]{0}', space=vmem, size = 0x8000, scoped, tag = 'input window, operand 4']
    #allocation7 [shape = 's32[2]{0}', space=sflag, size = 0x8, scoped, tag = 'scoped memory for tpu_custom_call.1']
    #allocation8 [shape = 'u8[32768]{0}', space=vmem, size = 0x8000, scoped, tag = 'input window, operand 6']
    #allocation9 [shape = 'u8[1024]{0}', space=vmem, size = 0x400, scoped, tag = 'output window, operand 0']
    %15 = vsyncpa [#allocation4], 0
    %s16 = scalar_lea.sflag [#allocation4], 1
    %17 = vsyncpa %s16, 0
    %18 = vsyncpa [#allocation7], 0
    %s19 = scalar_lea.sflag [#allocation7], 1
    %20 = vsyncpa %s19, 0
    %21 = vsyncpa [#allocation5], 0
    %s22 = scalar_lea.sflag [#allocation5], 1
    %23 = vsyncpa %s22, 0
    loop: start=0, step=1, limit=14
    $region2: #{tpu_custom_call.1} parent=1 // loop_pre_header
      _
    $region3: #{tpu_custom_call.1} parent=1 // loop_header
      %s25 = sphi 0, %s29
      %p26 = scmp.ge.s32.totalorder %s25, 14
      %s32 = sphi 0, %s44
      %s33 = sphi 0, %s40
      %s34 = sphi 0, %s32
      %s35 = sphi 0, %s33
      %s36 = sphi 0, %s34
      %s37 = sphi 0, %s35
      %s47 = sphi 0, %s49
      %s50 = sphi 0, %s47
      %s51 = sphi 0, %s50
      %s67 = sphi 0, %s51
      %s73 = sphi 0, %s75
      %s76 = sphi 0, %s73
      %s77 = sphi 0, %s76
      %s93 = sphi 0, %s77
      %s99 = sphi 0, %s101
      %s102 = sphi 0, %s99
      %s103 = sphi 0, %s102
      %s119 = sphi 0, %s103
      %s125 = sphi 0, %s127
      %s128 = sphi 0, %s125
      %s129 = sphi 0, %s128
      %s145 = sphi 0, %s129
      %s151 = sphi 0, %s153
      %s154 = sphi 0, %s151
      %s155 = sphi 0, %s154
      %s171 = sphi 0, %s155
      %s177 = sphi 0, %s179
      %s180 = sphi 0, %s177
      %s181 = sphi 0, %s180
      %s197 = sphi 0, %s181
      %s203 = sphi 0, %s205
      %s206 = sphi 0, %s203
      %s207 = sphi 0, %s206
      %s223 = sphi 0, %s207
      %s229 = sphi 0, %s231
      %s232 = sphi 0, %s229
      %s233 = sphi 0, %s232
      %s249 = sphi 0, %s233
      %s255 = sphi 0, %s257
      %s258 = sphi 0, %s255
      %s259 = sphi 0, %s258
      %s275 = sphi 0, %s259
      %s281 = sphi 0, %s283
      %s284 = sphi 0, %s281
      %s285 = sphi 0, %s284
      %s301 = sphi 0, %s285
      %s307 = sphi 0, %s309
      %s310 = sphi 0, %s307
      %s311 = sphi 0, %s310
      %s327 = sphi 0, %s311
    $region4: #{tpu_custom_call.1} parent=1 // loop_header_branch
      %28 = sbr.rel (%p26) target = $region8
    $region5: #{tpu_custom_call.1} parent=1 // loop_body
      %s30 = ssub.s32 %s25, 1
      %s31 = ssub.s32 %s25, 2
      %s38 = sadd.s32 1, %s33
      %p39 = scmp.ge.s32.totalorder %s38, 3
      %s40 = scalar_select %p39, 0, %s38
      %s41 = sadd.s32 1, %s32
      %s42 = scalar_select %p39, %s41, %s32
      %p43 = scmp.ge.s32.totalorder %s42, 4
      %s44 = scalar_select %p43, 0, %s42
      %s45 = ssub.s32 %s32, %s44
      %p46 = scmp.eq.s32.totalorder %s45, 0
      %s48 = sadd.s32 %s47, 1
      %s49 = scalar_select %p46, %s47, %s48
      %p52 = pneg %p46
      %p53 = scmp.eq.s32.totalorder %s25, 11
      %p54 = por %p52, %p53
      %p55 = scmp.ne.s32.totalorder %s47, %s50
      %p56 = scmp.eq.s32.totalorder %s25, 0
      %p57 = por %p55, %p56
      %p58 = scmp.ne.s32.totalorder %s47, %s50
      %p59 = scmp.eq.s32.totalorder %s30, 11
      %p60 = por %p58, %p59
      %p61 = scmp.ne.s32.totalorder %s50, %s51
      %p62 = scmp.eq.s32.totalorder %s30, 0
      %p63 = por %p61, %p62
      %p64 = scmp.ne.s32.totalorder %s50, %s51
      %p65 = scmp.eq.s32.totalorder %s31, 11
      %p66 = por %p64, %p65
      %p68 = scmp.ne.s32.totalorder %s51, %s67
      %p69 = scmp.eq.s32.totalorder %s31, 0
      %p70 = por %p68, %p69
      %s71 = ssub.s32 %s32, %s44
      %p72 = scmp.eq.s32.totalorder %s71, 0
      %s74 = sadd.s32 %s73, 1
      %s75 = scalar_select %p72, %s73, %s74
      %p78 = pneg %p72
      %p79 = scmp.eq.s32.totalorder %s25, 11
      %p80 = por %p78, %p79
      %p81 = scmp.ne.s32.totalorder %s73, %s76
      %p82 = scmp.eq.s32.totalorder %s25, 0
      %p83 = por %p81, %p82
      %p84 = scmp.ne.s32.totalorder %s73, %s76
      %p85 = scmp.eq.s32.totalorder %s30, 11
      %p86 = por %p84, %p85
      %p87 = scmp.ne.s32.totalorder %s76, %s77
      %p88 = scmp.eq.s32.totalorder %s30, 0
      %p89 = por %p87, %p88
      %p90 = scmp.ne.s32.totalorder %s76, %s77
      %p91 = scmp.eq.s32.totalorder %s31, 11
      %p92 = por %p90, %p91
      %p94 = scmp.ne.s32.totalorder %s77, %s93
      %p95 = scmp.eq.s32.totalorder %s31, 0
      %p96 = por %p94, %p95
      %s97 = ssub.s32 %s32, %s44
      %p98 = scmp.eq.s32.totalorder %s97, 0
      %s100 = sadd.s32 %s99, 1
      %s101 = scalar_select %p98, %s99, %s100
      %p104 = pneg %p98
      %p105 = scmp.eq.s32.totalorder %s25, 11
      %p106 = por %p104, %p105
      %p107 = scmp.ne.s32.totalorder %s99, %s102
      %p108 = scmp.eq.s32.totalorder %s25, 0
      %p109 = por %p107, %p108
      %p110 = scmp.ne.s32.totalorder %s99, %s102
      %p111 = scmp.eq.s32.totalorder %s30, 11
      %p112 = por %p110, %p111
      %p113 = scmp.ne.s32.totalorder %s102, %s103
      %p114 = scmp.eq.s32.totalorder %s30, 0
      %p115 = por %p113, %p114
      %p116 = scmp.ne.s32.totalorder %s102, %s103
      %p117 = scmp.eq.s32.totalorder %s31, 11
      %p118 = por %p116, %p117
      %p120 = scmp.ne.s32.totalorder %s103, %s119
      %p121 = scmp.eq.s32.totalorder %s31, 0
      %p122 = por %p120, %p121
      %s123 = ssub.s32 %s32, %s44
      %p124 = scmp.eq.s32.totalorder %s123, 0
      %s126 = sadd.s32 %s125, 1
      %s127 = scalar_select %p124, %s125, %s126
      %p130 = pneg %p124
      %p131 = scmp.eq.s32.totalorder %s25, 11
      %p132 = por %p130, %p131
      %p133 = scmp.ne.s32.totalorder %s125, %s128
      %p134 = scmp.eq.s32.totalorder %s25, 0
      %p135 = por %p133, %p134
      %p136 = scmp.ne.s32.totalorder %s125, %s128
      %p137 = scmp.eq.s32.totalorder %s30, 11
      %p138 = por %p136, %p137
      %p139 = scmp.ne.s32.totalorder %s128, %s129
      %p140 = scmp.eq.s32.totalorder %s30, 0
      %p141 = por %p139, %p140
      %p142 = scmp.ne.s32.totalorder %s128, %s129
      %p143 = scmp.eq.s32.totalorder %s31, 11
      %p144 = por %p142, %p143
      %p146 = scmp.ne.s32.totalorder %s129, %s145
      %p147 = scmp.eq.s32.totalorder %s31, 0
      %p148 = por %p146, %p147
      %s149 = ssub.s32 %s33, %s40
      %p150 = scmp.eq.s32.totalorder %s149, 0
      %s152 = sadd.s32 %s151, 1
      %s153 = scalar_select %p150, %s151, %s152
      %p156 = pneg %p150
      %p157 = scmp.eq.s32.totalorder %s25, 11
      %p158 = por %p156, %p157
      %p159 = scmp.ne.s32.totalorder %s151, %s154
      %p160 = scmp.eq.s32.totalorder %s25, 0
      %p161 = por %p159, %p160
      %p162 = scmp.ne.s32.totalorder %s151, %s154
      %p163 = scmp.eq.s32.totalorder %s30, 11
      %p164 = por %p162, %p163
      %p165 = scmp.ne.s32.totalorder %s154, %s155
      %p166 = scmp.eq.s32.totalorder %s30, 0
      %p167 = por %p165, %p166
      %p168 = scmp.ne.s32.totalorder %s154, %s155
      %p169 = scmp.eq.s32.totalorder %s31, 11
      %p170 = por %p168, %p169
      %p172 = scmp.ne.s32.totalorder %s155, %s171
      %p173 = scmp.eq.s32.totalorder %s31, 0
      %p174 = por %p172, %p173
      %s175 = ssub.s32 %s33, %s40
      %p176 = scmp.eq.s32.totalorder %s175, 0
      %s178 = sadd.s32 %s177, 1
      %s179 = scalar_select %p176, %s177, %s178
      %p182 = pneg %p176
      %p183 = scmp.eq.s32.totalorder %s25, 11
      %p184 = por %p182, %p183
      %p185 = scmp.ne.s32.totalorder %s177, %s180
      %p186 = scmp.eq.s32.totalorder %s25, 0
      %p187 = por %p185, %p186
      %p188 = scmp.ne.s32.totalorder %s177, %s180
      %p189 = scmp.eq.s32.totalorder %s30, 11
      %p190 = por %p188, %p189
      %p191 = scmp.ne.s32.totalorder %s180, %s181
      %p192 = scmp.eq.s32.totalorder %s30, 0
      %p193 = por %p191, %p192
      %p194 = scmp.ne.s32.totalorder %s180, %s181
      %p195 = scmp.eq.s32.totalorder %s31, 11
      %p196 = por %p194, %p195
      %p198 = scmp.ne.s32.totalorder %s181, %s197
      %p199 = scmp.eq.s32.totalorder %s31, 0
      %p200 = por %p198, %p199
      %s201 = ssub.s32 %s33, %s40
      %p202 = scmp.eq.s32.totalorder %s201, 0
      %s204 = sadd.s32 %s203, 1
      %s205 = scalar_select %p202, %s203, %s204
      %p208 = pneg %p202
      %p209 = scmp.eq.s32.totalorder %s25, 11
      %p210 = por %p208, %p209
      %p211 = scmp.ne.s32.totalorder %s203, %s206
      %p212 = scmp.eq.s32.totalorder %s25, 0
      %p213 = por %p211, %p212
      %p214 = scmp.ne.s32.totalorder %s203, %s206
      %p215 = scmp.eq.s32.totalorder %s30, 11
      %p216 = por %p214, %p215
      %p217 = scmp.ne.s32.totalorder %s206, %s207
      %p218 = scmp.eq.s32.totalorder %s30, 0
      %p219 = por %p217, %p218
      %p220 = scmp.ne.s32.totalorder %s206, %s207
      %p221 = scmp.eq.s32.totalorder %s31, 11
      %p222 = por %p220, %p221
      %p224 = scmp.ne.s32.totalorder %s207, %s223
      %p225 = scmp.eq.s32.totalorder %s31, 0
      %p226 = por %p224, %p225
      %s227 = ssub.s32 %s33, %s40
      %p228 = scmp.eq.s32.totalorder %s227, 0
      %s230 = sadd.s32 %s229, 1
      %s231 = scalar_select %p228, %s229, %s230
      %p234 = pneg %p228
      %p235 = scmp.eq.s32.totalorder %s25, 11
      %p236 = por %p234, %p235
      %p237 = scmp.ne.s32.totalorder %s229, %s232
      %p238 = scmp.eq.s32.totalorder %s25, 0
      %p239 = por %p237, %p238
      %p240 = scmp.ne.s32.totalorder %s229, %s232
      %p241 = scmp.eq.s32.totalorder %s30, 11
      %p242 = por %p240, %p241
      %p243 = scmp.ne.s32.totalorder %s232, %s233
      %p244 = scmp.eq.s32.totalorder %s30, 0
      %p245 = por %p243, %p244
      %p246 = scmp.ne.s32.totalorder %s232, %s233
      %p247 = scmp.eq.s32.totalorder %s31, 11
      %p248 = por %p246, %p247
      %p250 = scmp.ne.s32.totalorder %s233, %s249
      %p251 = scmp.eq.s32.totalorder %s31, 0
      %p252 = por %p250, %p251
      %s253 = ssub.s32 %s33, %s40
      %p254 = scmp.eq.s32.totalorder %s253, 0
      %s256 = sadd.s32 %s255, 1
      %s257 = scalar_select %p254, %s255, %s256
      %p260 = pneg %p254
      %p261 = scmp.eq.s32.totalorder %s25, 11
      %p262 = por %p260, %p261
      %p263 = scmp.ne.s32.totalorder %s255, %s258
      %p264 = scmp.eq.s32.totalorder %s25, 0
      %p265 = por %p263, %p264
      %p266 = scmp.ne.s32.totalorder %s255, %s258
      %p267 = scmp.eq.s32.totalorder %s30, 11
      %p268 = por %p266, %p267
      %p269 = scmp.ne.s32.totalorder %s258, %s259
      %p270 = scmp.eq.s32.totalorder %s30, 0
      %p271 = por %p269, %p270
      %p272 = scmp.ne.s32.totalorder %s258, %s259
      %p273 = scmp.eq.s32.totalorder %s31, 11
      %p274 = por %p272, %p273
      %p276 = scmp.ne.s32.totalorder %s259, %s275
      %p277 = scmp.eq.s32.totalorder %s31, 0
      %p278 = por %p276, %p277
      %s279 = ssub.s32 %s33, %s40
      %p280 = scmp.eq.s32.totalorder %s279, 0
      %s282 = sadd.s32 %s281, 1
      %s283 = scalar_select %p280, %s281, %s282
      %p286 = pneg %p280
      %p287 = scmp.eq.s32.totalorder %s25, 11
      %p288 = por %p286, %p287
      %p289 = scmp.ne.s32.totalorder %s281, %s284
      %p290 = scmp.eq.s32.totalorder %s25, 0
      %p291 = por %p289, %p290
      %p292 = scmp.ne.s32.totalorder %s281, %s284
      %p293 = scmp.eq.s32.totalorder %s30, 11
      %p294 = por %p292, %p293
      %p295 = scmp.ne.s32.totalorder %s284, %s285
      %p296 = scmp.eq.s32.totalorder %s30, 0
      %p297 = por %p295, %p296
      %p298 = scmp.ne.s32.totalorder %s284, %s285
      %p299 = scmp.eq.s32.totalorder %s31, 11
      %p300 = por %p298, %p299
      %p302 = scmp.ne.s32.totalorder %s285, %s301
      %p303 = scmp.eq.s32.totalorder %s31, 0
      %p304 = por %p302, %p303
      %s305 = ssub.s32 %s32, %s44
      %p306 = scmp.eq.s32.totalorder %s305, 0
      %s308 = sadd.s32 %s307, 1
      %s309 = scalar_select %p306, %s307, %s308
      %p312 = pneg %p306
      %p313 = scmp.eq.s32.totalorder %s25, 11
      %p314 = por %p312, %p313
      %p315 = scmp.ne.s32.totalorder %s307, %s310
      %p316 = scmp.eq.s32.totalorder %s25, 0
      %p317 = por %p315, %p316
      %p318 = scmp.ne.s32.totalorder %s307, %s310
      %p319 = scmp.eq.s32.totalorder %s30, 11
      %p320 = por %p318, %p319
      %p321 = scmp.ne.s32.totalorder %s310, %s311
      %p322 = scmp.eq.s32.totalorder %s30, 0
      %p323 = por %p321, %p322
      %p324 = scmp.ne.s32.totalorder %s310, %s311
      %p325 = scmp.eq.s32.totalorder %s31, 11
      %p326 = por %p324, %p325
      %p328 = scmp.ne.s32.totalorder %s311, %s327
      %p329 = scmp.eq.s32.totalorder %s31, 0
      %p330 = por %p328, %p329
      %p331 = scmp.le.s32.totalorder 1, %s25
      %p332 = scmp.lt.s32.totalorder %s25, 13
      %p333 = pnand %p331, %p332
      %p334 = pneg %p333
      // Predicated region
      $region9: #{tpu_custom_call.1} parent=5 // pred_check
        _
      $region10: #{tpu_custom_call.1} parent=5 // pred_check_branch
        %336 = sbr.rel (%p333) target = $region12
      $region11: #{tpu_custom_call.1} parent=5 // pred_region
        %s337 = ssub.s32 %s25, 1
      $region12: #{tpu_custom_call.1} parent=5 // pred_fallthru
        _
      %p338 = scmp.lt.s32.totalorder %s25, 12
      // Predicated region
      $region13: #{tpu_custom_call.1} parent=5 // pred_check
        %p339 = pneg %p338
      $region14: #{tpu_custom_call.1} parent=5 // pred_check_branch
        %341 = sbr.rel (%p339) target = $region16
      $region15: #{tpu_custom_call.1} parent=5 // pred_region
        // Predicated region
        $region17: #{tpu_custom_call.1} parent=15 // pred_check
          %p342 = pneg %p57
        $region18: #{tpu_custom_call.1} parent=15 // pred_check_branch
          %344 = sbr.rel (%p342) target = $region20
        $region19: #{tpu_custom_call.1} parent=15 // pred_region
          %p345 = scmp.lt.s32.totalorder %s32, 3
          %s346 = scalar_select %p345, %s32, 3
          %s347 = smul.addr %s346, 8
          %s348 = scalar_lea.vmem %s0, %s347
        $region20: #{tpu_custom_call.1} parent=15 // pred_fallthru
          _
        // Predicated region
        $region21: #{tpu_custom_call.1} parent=15 // pred_check
          %p349 = pneg %p83
        $region22: #{tpu_custom_call.1} parent=15 // pred_check_branch
          %351 = sbr.rel (%p349) target = $region24
        $region23: #{tpu_custom_call.1} parent=15 // pred_region
          %p352 = scmp.lt.s32.totalorder %s32, 3
          %s353 = scalar_select %p352, %s32, 3
          %s354 = scalar_lea.vmem %s1, %s353
        $region24: #{tpu_custom_call.1} parent=15 // pred_fallthru
          _
        // Predicated region
        $region25: #{tpu_custom_call.1} parent=15 // pred_check
          %p355 = pneg %p109
        $region26: #{tpu_custom_call.1} parent=15 // pred_check_branch
          %357 = sbr.rel (%p355) target = $region28
        $region27: #{tpu_custom_call.1} parent=15 // pred_region
          %p358 = scmp.lt.s32.totalorder %s32, 3
          %s359 = scalar_select %p358, %s32, 3
          %s360 = smul.addr %s359, 8
          %s361 = scalar_lea.vmem %s2, %s360
        $region28: #{tpu_custom_call.1} parent=15 // pred_fallthru
          _
        // Predicated region
        $region29: #{tpu_custom_call.1} parent=15 // pred_check
          %p362 = pneg %p135
        $region30: #{tpu_custom_call.1} parent=15 // pred_check_branch
          %364 = sbr.rel (%p362) target = $region32
        $region31: #{tpu_custom_call.1} parent=15 // pred_region
          %s365 = sand.u32 %s125, 1
          %s366 = scalar_lea.sflag [#allocation4], %s365
          %s367 = sand.u32 %s125, 1
          %s368 = smul.addr %s367, 8
          %s369 = scalar_lea.vmem [#allocation3], %s368
          %s371 = ssub.s32 128, 128
          %372 = vsyncadd %s366, %s371
          %s373 = smul.addr %s32, 128
          %s374 = scalar_lea.hbm %s3, %s373
          %s376 = sshll.u32 %s369, 4
          %s377 = int_to_ptr.vmem [resolvable:$true] %s376
          %379 = dma.hbm_to_vmem [thread:$0]  %s374, 128, %s377, %s366
        $region32: #{tpu_custom_call.1} parent=15 // pred_fallthru
          _
        // Predicated region
        $region33: #{tpu_custom_call.1} parent=15 // pred_check
          %p380 = pneg %p161
        $region34: #{tpu_custom_call.1} parent=15 // pred_check_branch
          %382 = sbr.rel (%p380) target = $region36
        $region35: #{tpu_custom_call.1} parent=15 // pred_region
          %s383 = sand.u32 %s25, 1
          %s384 = scalar_lea.sflag [#allocation7], %s383
          %s385 = sand.u32 %s151, 1
          %s386 = smul.addr %s385, 32
          %s387 = scalar_lea.vmem [#allocation6], %s386
          %s389 = ssub.s32 512, 512
          %390 = vsyncadd %s384, %s389
          %s391 = smul.addr %s33, 4
          %s392 = smul.addr %s391, 128
          %s393 = scalar_lea.hbm %s4, %s392
          %s394 = sshll.u32 %s387, 4
          %s395 = int_to_ptr.vmem [resolvable:$true] %s394
          %400 = dma.hbm_to_vmem [thread:$0]  %s393, 512, %s395, %s384, 128, 128, 8
        $region36: #{tpu_custom_call.1} parent=15 // pred_fallthru
          _
        // Predicated region
        $region37: #{tpu_custom_call.1} parent=15 // pred_check
          %p401 = pneg %p187
        $region38: #{tpu_custom_call.1} parent=15 // pred_check_branch
          %403 = sbr.rel (%p401) target = $region40
        $region39: #{tpu_custom_call.1} parent=15 // pred_region
          %p404 = scmp.lt.s32.totalorder %s33, 2
          %s405 = scalar_select %p404, %s33, 2
          %s406 = scalar_lea.vmem %s5, %s405
        $region40: #{tpu_custom_call.1} parent=15 // pred_fallthru
          _
        // Predicated region
        $region41: #{tpu_custom_call.1} parent=15 // pred_check
          %p407 = pneg %p213
        $region42: #{tpu_custom_call.1} parent=15 // pred_check_branch
          %409 = sbr.rel (%p407) target = $region44
        $region43: #{tpu_custom_call.1} parent=15 // pred_region
          %s410 = sand.u32 %s25, 1
          %s411 = scalar_lea.sflag [#allocation7], %s410
          %s412 = sand.u32 %s203, 1
          %s413 = smul.addr %s412, 32
          %s414 = scalar_lea.vmem [#allocation8], %s413
          %s416 = ssub.s32 512, 512
          %417 = vsyncadd %s411, %s416
          %s418 = smul.addr %s33, 4
          %s419 = smul.addr %s418, 128
          %s420 = scalar_lea.hbm %s6, %s419
          %s421 = sshll.u32 %s414, 4
          %s422 = int_to_ptr.vmem [resolvable:$true] %s421
          %427 = dma.hbm_to_vmem [thread:$0]  %s420, 512, %s422, %s411, 128, 128, 8
        $region44: #{tpu_custom_call.1} parent=15 // pred_fallthru
          _
        // Predicated region
        $region45: #{tpu_custom_call.1} parent=15 // pred_check
          %p428 = pneg %p239
        $region46: #{tpu_custom_call.1} parent=15 // pred_check_branch
          %430 = sbr.rel (%p428) target = $region48
        $region47: #{tpu_custom_call.1} parent=15 // pred_region
          %p431 = scmp.lt.s32.totalorder %s33, 2
          %s432 = scalar_select %p431, %s33, 2
          %s433 = scalar_lea.vmem %s7, %s432
        $region48: #{tpu_custom_call.1} parent=15 // pred_fallthru
          _
        // Predicated region
        $region49: #{tpu_custom_call.1} parent=15 // pred_check
          %p434 = pneg %p265
        $region50: #{tpu_custom_call.1} parent=15 // pred_check_branch
          %436 = sbr.rel (%p434) target = $region52
        $region51: #{tpu_custom_call.1} parent=15 // pred_region
          %p437 = scmp.lt.s32.totalorder %s33, 2
          %s438 = scalar_select %p437, %s33, 2
          %s439 = scalar_lea.vmem %s8, %s438
        $region52: #{tpu_custom_call.1} parent=15 // pred_fallthru
          _
        // Predicated region
        $region53: #{tpu_custom_call.1} parent=15 // pred_check
          %p440 = pneg %p291
        $region54: #{tpu_custom_call.1} parent=15 // pred_check_branch
          %442 = sbr.rel (%p440) target = $region56
        $region55: #{tpu_custom_call.1} parent=15 // pred_region
          %p443 = scmp.lt.s32.totalorder %s33, 2
          %s444 = scalar_select %p443, %s33, 2
          %s445 = scalar_lea.vmem %s9, %s444
        $region56: #{tpu_custom_call.1} parent=15 // pred_fallthru
          _
      $region16: #{tpu_custom_call.1} parent=5 // pred_fallthru
        _
      %p446 = scmp.le.s32.totalorder 1, %s25
      %p447 = scmp.lt.s32.totalorder %s25, 13
      %p448 = pnand %p446, %p447
      %p449 = pneg %p448
      // Predicated region
      $region57: #{tpu_custom_call.1} parent=5 // pred_check
        _
      $region58: #{tpu_custom_call.1} parent=5 // pred_check_branch
        %451 = sbr.rel (%p448) target = $region60
      $region59: #{tpu_custom_call.1} parent=5 // pred_region
        %s452 = ssub.s32 %s25, 1
        %s453 = sand.u32 %s128, 1
        %s454 = scalar_lea.sflag [#allocation4], %s453
        %s455 = sand.u32 %s128, 1
        %s456 = smul.addr %s455, 8
        %s457 = scalar_lea.vmem [#allocation3], %s456
        // Predicated region
        $region61: #{tpu_custom_call.1} parent=59 // pred_check
          %p458 = pneg %p141
        $region62: #{tpu_custom_call.1} parent=59 // pred_check_branch
          %460 = sbr.rel (%p458) target = $region64
        $region63: #{tpu_custom_call.1} parent=59 // pred_region
          %461 = dma.done %s454, 128
        $region64: #{tpu_custom_call.1} parent=59 // pred_fallthru
          _
        %s462 = sand.u32 %s30, 1
        %s463 = scalar_lea.sflag [#allocation7], %s462
        %s464 = sand.u32 %s154, 1
        %s465 = smul.addr %s464, 32
        %s466 = scalar_lea.vmem [#allocation6], %s465
        // Predicated region
        $region65: #{tpu_custom_call.1} parent=59 // pred_check
          %p467 = pneg %p167
        $region66: #{tpu_custom_call.1} parent=59 // pred_check_branch
          %469 = sbr.rel (%p467) target = $region68
        $region67: #{tpu_custom_call.1} parent=59 // pred_region
          %470 = dma.done %s463, 512
        $region68: #{tpu_custom_call.1} parent=59 // pred_fallthru
          _
        %s471 = sand.u32 %s30, 1
        %s472 = scalar_lea.sflag [#allocation7], %s471
        %s473 = sand.u32 %s206, 1
        %s474 = smul.addr %s473, 32
        %s475 = scalar_lea.vmem [#allocation8], %s474
        // Predicated region
        $region69: #{tpu_custom_call.1} parent=59 // pred_check
          %p476 = pneg %p219
        $region70: #{tpu_custom_call.1} parent=59 // pred_check_branch
          %478 = sbr.rel (%p476) target = $region72
        $region71: #{tpu_custom_call.1} parent=59 // pred_region
          %479 = dma.done %s472, 512
        $region72: #{tpu_custom_call.1} parent=59 // pred_fallthru
          _
        %p480 = scmp.lt.s32.totalorder %s34, 3
        %s481 = scalar_select %p480, %s34, 3
        %s482 = smul.addr %s481, 8
        %s483 = scalar_lea.vmem %s0, %s482
        %p484 = pneg %p63
        %p485 = pneg %p60
        %p486 = scmp.lt.s32.totalorder %s34, 3
        %s487 = scalar_select %p486, %s34, 3
        %s488 = scalar_lea.vmem %s1, %s487
        %p489 = pneg %p89
        %p490 = pneg %p86
        %p491 = scmp.lt.s32.totalorder %s34, 3
        %s492 = scalar_select %p491, %s34, 3
        %s493 = smul.addr %s492, 8
        %s494 = scalar_lea.vmem %s2, %s493
        %p495 = pneg %p115
        %p496 = pneg %p112
        %s497 = sand.u32 %s128, 1
        %s498 = scalar_lea.sflag [#allocation4], %s497
        %s499 = sand.u32 %s128, 1
        %s500 = smul.addr %s499, 8
        %s501 = scalar_lea.vmem [#allocation3], %s500
        %p502 = pneg %p141
        %p503 = pneg %p138
        %s504 = sand.u32 %s30, 1
        %s505 = scalar_lea.sflag [#allocation7], %s504
        %s506 = sand.u32 %s154, 1
        %s507 = smul.addr %s506, 32
        %s508 = scalar_lea.vmem [#allocation6], %s507
        %p509 = pneg %p167
        %p510 = pneg %p164
        %p511 = scmp.lt.s32.totalorder %s35, 2
        %s512 = scalar_select %p511, %s35, 2
        %s513 = scalar_lea.vmem %s5, %s512
        %p514 = pneg %p193
        %p515 = pneg %p190
        %s516 = sand.u32 %s30, 1
        %s517 = scalar_lea.sflag [#allocation7], %s516
        %s518 = sand.u32 %s206, 1
        %s519 = smul.addr %s518, 32
        %s520 = scalar_lea.vmem [#allocation8], %s519
        %p521 = pneg %p219
        %p522 = pneg %p216
        %p523 = scmp.lt.s32.totalorder %s35, 2
        %s524 = scalar_select %p523, %s35, 2
        %s525 = scalar_lea.vmem %s7, %s524
        %p526 = pneg %p245
        %p527 = pneg %p242
        %p528 = scmp.lt.s32.totalorder %s35, 2
        %s529 = scalar_select %p528, %s35, 2
        %s530 = scalar_lea.vmem %s8, %s529
        %p531 = pneg %p271
        %p532 = pneg %p268
        %p533 = scmp.lt.s32.totalorder %s35, 2
        %s534 = scalar_select %p533, %s35, 2
        %s535 = scalar_lea.vmem %s9, %s534
        %p536 = pneg %p297
        %p537 = pneg %p294
        %p538 = pneg %p323
        %p539 = pneg %p320
        %s540 = sand.u32 %s310, 1
        %s541 = scalar_lea.sflag [#allocation5], %s540
        %s542 = sand.u32 %s310, 1
        %s543 = scalar_lea.vmem [#allocation9], %s542
        %p544 = scmp.lt.s32.totalorder %s34, 3
        %s545 = scalar_select %p544, %s34, 3
        %s546 = smul.addr %s545, 8
        %s547 = scalar_lea.vmem %s0, %s546
        %p548 = scmp.lt.s32.totalorder %s34, 3
        %s549 = scalar_select %p548, %s34, 3
        %s550 = scalar_lea.vmem %s1, %s549
        %p551 = scmp.lt.s32.totalorder %s34, 3
        %s552 = scalar_select %p551, %s34, 3
        %s553 = smul.addr %s552, 8
        %s554 = scalar_lea.vmem %s2, %s553
        %p555 = scmp.lt.s32.totalorder %s35, 2
        %s556 = scalar_select %p555, %s35, 2
        %s557 = scalar_lea.vmem %s5, %s556
        %p558 = scmp.lt.s32.totalorder %s35, 2
        %s559 = scalar_select %p558, %s35, 2
        %s560 = scalar_lea.vmem %s7, %s559
        %p561 = scmp.lt.s32.totalorder %s35, 2
        %s562 = scalar_select %p561, %s35, 2
        %s563 = scalar_lea.vmem %s8, %s562
        %p564 = scmp.lt.s32.totalorder %s35, 2
        %s565 = scalar_select %p564, %s35, 2
        %s566 = scalar_lea.vmem %s9, %s565
        %p567 = scmp.eq.s32.totalorder %s35, 0
        // Predicated region
        $region73: #{tpu_custom_call.1} parent=59 // pred_check
          %p568 = pneg %p567
        $region74: #{tpu_custom_call.1} parent=59 // pred_check_branch
          %570 = sbr.rel (%p568) target = $region76
        $region75: #{tpu_custom_call.1} parent=59 // pred_region
          %v571 = vld [vmem:[%s547] sm:$0xff]
          %vm572 = vcmask 261120
          %573 = vst.msk [vmem:[#allocation2] sm:$0xff] %vm572, %v571
        $region76: #{tpu_custom_call.1} parent=59 // pred_fallthru
          _
        %v574 = vld [vmem:[#allocation2] sm:$0xff]
        %v575 = vld [vmem:[%s550] sm:$0x1]
        %v576 = vld [vmem:[%s554] sm:$0xff]
        %578 = vset.pattern.permute.xlu0 0
        %579 = vperm.xlu0 %578, %v576
        %v580 = vpop.permute.xlu0 %579
        %v583 = vlaneseq
        %v584 = vshrl.u32 %v583, 7
        %v585 = vsub.s32 0, %v584
        %v586 = vrot.slane %v575, %v585
        %v588 = vmul.f32 %v580, %v586
        %v589 = vld [vmem:[%s466] sm:$0xff]
        %v590 = vld [vmem:[%s466 + $0x8] sm:$0xff]
        %v591 = vld [vmem:[%s466 + $0x10] sm:$0xff]
        %v592 = vld [vmem:[%s466 + $0x18] sm:$0xff]
        %v593 = vld [vmem:[%s557] sm:$0x1]
        %v595 = vlaneseq
        %v596 = vshrl.u32 %v595, 7
        %v597 = vsub.s32 0, %v596
        %v598 = vrot.slane %v593, %v597
        %vm600 = vcmask 261120
        %v602 = vsel %vm600, %v574, 0
        %604 = vmatprep.subr.mxu0 0.0
        %605 = vmatpush1.msra.mxu0 %v589
        %606 = vmatprep.subr.mxu0 0.0
        %607 = vmatpush1.msra.mxu0 %v590
        %608 = vmatprep.subr.mxu0 0.0
        %609 = vmatpush1.msra.mxu0 %v591
        %610 = vmatprep.subr.mxu0 0.0
        %611 = vmatpush1.msra.mxu0 %v592
        %612 = vmatprep.subr.mxu0 0.0
        %613 = vmatpush1.msra.mxu0 0.0
        %614 = vmatprep.subr.mxu0 0.0
        %615 = vmatpush1.msra.mxu0 0.0
        %616 = vmatprep.subr.mxu0 0.0
        %617 = vmatpush1.msra.mxu0 0.0
        %618 = vmatprep.subr.mxu0 0.0
        %619 = vmatpush1.msra.mxu0 0.0
        %620 = vmatprep.subr.mxu0 0.0
        %621 = vmatpush1.msra.mxu0 0.0
        %622 = vmatprep.subr.mxu0 0.0
        %623 = vmatpush1.msra.mxu0 0.0
        %624 = vmatprep.subr.mxu0 0.0
        %625 = vmatpush1.msra.mxu0 0.0
        %626 = vmatprep.subr.mxu0 0.0
        %627 = vmatpush1.msra.mxu0 0.0
        %628 = vmatprep.subr.mxu0 0.0
        %629 = vmatpush1.msra.mxu0 0.0
        %630 = vmatprep.subr.mxu0 0.0
        %631 = vmatpush1.msra.mxu0 0.0
        %632 = vmatprep.subr.mxu0 0.0
        %633 = vmatpush1.msra.mxu0 0.0
        %634 = vmatprep.subr.mxu0 0.0
        %635 = vmatpush1.msra.mxu0 0.0
        %636 = vmatprep.subr.mxu0 0.0
        %637 = vmatpush1.msra.mxu0 0.0
        %638 = vmatprep.subr.mxu0 0.0
        %639 = vmatpush1.msra.mxu0 0.0
        %640 = vmatprep.subr.mxu0 0.0
        %641 = vmatpush1.msra.mxu0 0.0
        %642 = vmatprep.subr.mxu0 0.0
        %643 = vmatpush1.msra.mxu0 0.0
        %644 = vmatprep.subr.mxu0 0.0
        %645 = vmatpush1.msra.mxu0 0.0
        %646 = vmatprep.subr.mxu0 0.0
        %647 = vmatpush1.msra.mxu0 0.0
        %648 = vmatprep.subr.mxu0 0.0
        %649 = vmatpush1.msra.mxu0 0.0
        %650 = vmatprep.subr.mxu0 0.0
        %651 = vmatpush1.msra.mxu0 0.0
        %652 = vmatprep.subr.mxu0 0.0
        %653 = vmatpush1.msra.mxu0 0.0
        %654 = vmatprep.subr.mxu0 0.0
        %655 = vmatpush1.msra.mxu0 0.0
        %656 = vmatprep.subr.mxu0 0.0
        %657 = vmatpush1.msra.mxu0 0.0
        %658 = vmatprep.subr.mxu0 0.0
        %659 = vmatpush1.msra.mxu0 0.0
        %660 = vmatprep.subr.mxu0 0.0
        %661 = vmatpush1.msra.mxu0 0.0
        %662 = vmatprep.subr.mxu0 0.0
        %663 = vmatpush1.msra.mxu0 0.0
        %664 = vmatprep.subr.mxu0 0.0
        %665 = vmatpush1.msra.mxu0 0.0
        %666 = vmatprep.subr.mxu0 0.0
        %667 = vmatpush1.msra.mxu0 0.0
        %668 = vmatprep.mubr.f32.mxu0 0.0
        %669 = vmatmul.mubr.f32.gmra.mrb[0].mxu0 %v602
        %v670 = vpop.f32.mrb[0].mxu0
        %v671 = vadd.f32 %v598, %v670
        %v672 = vpop.f32.mrb[0].mxu0
        %673 = vdwg.mxu0
        %v674 = vld [vmem:[%s475] sm:$0xff]
        %v675 = vld [vmem:[%s475 + $0x8] sm:$0xff]
        %v676 = vld [vmem:[%s475 + $0x10] sm:$0xff]
        %v677 = vld [vmem:[%s475 + $0x18] sm:$0xff]
        %v678 = vmul.f32 %v671, 0.35355338
        %680 = vrot.lane.b32.xlu0 %v671, 96
        %v681 = vpop.permute.xlu0 %680
        %vm682 = vcmask 64512
        %v684 = vsel %vm682, %v678, 0
        %v686 = vsel %vm682, %v681, 0
        %688 = vmatprep.subr.mxu0 0.0
        %689 = vmatpush1.xpose.msra.mxu0 %v686
        %690 = vmatprep.subr.mxu0 0.0
        %691 = vmatpush1.xpose.msra.mxu0 0.0
        %692 = vmatprep.subr.mxu0 0.0
        %693 = vmatpush1.xpose.msra.mxu0 0.0
        %694 = vmatprep.subr.mxu0 0.0
        %695 = vmatpush1.xpose.msra.mxu0 0.0
        %696 = vmatprep.subr.mxu0 0.0
        %697 = vmatpush1.xpose.msra.mxu0 0.0
        %698 = vmatprep.subr.mxu0 0.0
        %699 = vmatpush1.xpose.msra.mxu0 0.0
        %700 = vmatprep.subr.mxu0 0.0
        %701 = vmatpush1.xpose.msra.mxu0 0.0
        %702 = vmatprep.subr.mxu0 0.0
        %703 = vmatpush1.xpose.msra.mxu0 0.0
        %704 = vmatprep.subr.mxu0 0.0
        %705 = vmatpush1.xpose.msra.mxu0 0.0
        %706 = vmatprep.subr.mxu0 0.0
        %707 = vmatpush1.xpose.msra.mxu0 0.0
        %708 = vmatprep.subr.mxu0 0.0
        %709 = vmatpush1.xpose.msra.mxu0 0.0
        %710 = vmatprep.subr.mxu0 0.0
        %711 = vmatpush1.xpose.msra.mxu0 0.0
        %712 = vmatprep.subr.mxu0 0.0
        %713 = vmatpush1.xpose.msra.mxu0 0.0
        %714 = vmatprep.subr.mxu0 0.0
        %715 = vmatpush1.xpose.msra.mxu0 0.0
        %716 = vmatprep.subr.mxu0 0.0
        %717 = vmatpush1.xpose.msra.mxu0 0.0
        %718 = vmatprep.subr.mxu0 0.0
        %719 = vmatpush1.xpose.msra.mxu0 0.0
        %720 = vmatprep.subr.mxu0 0.0
        %721 = vmatpush1.xpose.msra.mxu0 0.0
        %722 = vmatprep.subr.mxu0 0.0
        %723 = vmatpush1.xpose.msra.mxu0 0.0
        %724 = vmatprep.subr.mxu0 0.0
        %725 = vmatpush1.xpose.msra.mxu0 0.0
        %726 = vmatprep.subr.mxu0 0.0
        %727 = vmatpush1.xpose.msra.mxu0 0.0
        %728 = vmatprep.subr.mxu0 0.0
        %729 = vmatpush1.xpose.msra.mxu0 0.0
        %730 = vmatprep.subr.mxu0 0.0
        %731 = vmatpush1.xpose.msra.mxu0 0.0
        %732 = vmatprep.subr.mxu0 0.0
        %733 = vmatpush1.xpose.msra.mxu0 0.0
        %734 = vmatprep.subr.mxu0 0.0
        %735 = vmatpush1.xpose.msra.mxu0 0.0
        %736 = vmatprep.subr.mxu0 0.0
        %737 = vmatpush1.xpose.msra.mxu0 0.0
        %738 = vmatprep.subr.mxu0 0.0
        %739 = vmatpush1.xpose.msra.mxu0 0.0
        %740 = vmatprep.subr.mxu0 0.0
        %741 = vmatpush1.xpose.msra.mxu0 0.0
        %742 = vmatprep.subr.mxu0 0.0
        %743 = vmatpush1.xpose.msra.mxu0 0.0
        %744 = vmatprep.subr.mxu0 0.0
        %745 = vmatpush1.xpose.msra.mxu0 0.0
        %746 = vmatprep.subr.mxu0 0.0
        %747 = vmatpush1.xpose.msra.mxu0 0.0
        %748 = vmatprep.subr.mxu0 0.0
        %749 = vmatpush1.xpose.msra.mxu0 0.0
        %750 = vmatprep.subr.mxu0 0.0
        %751 = vmatpush1.xpose.msra.mxu0 0.0
        %752 = vmatprep.mubr.f32.mxu0 0.0
        %753 = vmatmul.mubr.f32.gmra.mrb[0].mxu0 %v684
        %v754 = vpop.f32.mrb[0].mxu0
        %v755 = vadd.f32 %v588, %v754
        %v756 = vpop.f32.mrb[0].mxu0
        %757 = vdwg.mxu0
        %v758 = vsel %vm682, %v755, -inf
        %759 = vmax.xlane.f32.xlu0 %v758
        %v760 = vpop.xlane.xlu0 %759
        %v761 = vsub.f32 %v755, %v760
        %v762 = vmul.f32 %v761, 1.442695
        %v763 = vpow.pop %v762
        %v764 = vsel %vm682, %v763, 0.0
        %765 = vadd.xlane.f32.xlu0 %v764
        %v766 = vpop.xlane.xlu0 %765
        %v767 = vrcp.pop %v766
        %v768 = vmul.f32 %v763, %v767
        %769 = vrot.lane.b32.xlu0 %v671, 64
        %v770 = vpop.permute.xlu0 %769
        %v773 = vsel %vm682, %v768, 0
        %775 = vmatprep.subr.mxu0 0.0
        %776 = vmatpush1.msra.mxu0 %v770
        %777 = vmatprep.subr.mxu0 0.0
        %778 = vmatpush1.msra.mxu0 0.0
        %779 = vmatprep.subr.mxu0 0.0
        %780 = vmatpush1.msra.mxu0 0.0
        %781 = vmatprep.subr.mxu0 0.0
        %782 = vmatpush1.msra.mxu0 0.0
        %783 = vmatprep.subr.mxu0 0.0
        %784 = vmatpush1.msra.mxu0 0.0
        %785 = vmatprep.subr.mxu0 0.0
        %786 = vmatpush1.msra.mxu0 0.0
        %787 = vmatprep.subr.mxu0 0.0
        %788 = vmatpush1.msra.mxu0 0.0
        %789 = vmatprep.subr.mxu0 0.0
        %790 = vmatpush1.msra.mxu0 0.0
        %791 = vmatprep.subr.mxu0 0.0
        %792 = vmatpush1.msra.mxu0 0.0
        %793 = vmatprep.subr.mxu0 0.0
        %794 = vmatpush1.msra.mxu0 0.0
        %795 = vmatprep.subr.mxu0 0.0
        %796 = vmatpush1.msra.mxu0 0.0
        %797 = vmatprep.subr.mxu0 0.0
        %798 = vmatpush1.msra.mxu0 0.0
        %799 = vmatprep.subr.mxu0 0.0
        %800 = vmatpush1.msra.mxu0 0.0
        %801 = vmatprep.subr.mxu0 0.0
        %802 = vmatpush1.msra.mxu0 0.0
        %803 = vmatprep.subr.mxu0 0.0
        %804 = vmatpush1.msra.mxu0 0.0
        %805 = vmatprep.subr.mxu0 0.0
        %806 = vmatpush1.msra.mxu0 0.0
        %807 = vmatprep.subr.mxu0 0.0
        %808 = vmatpush1.msra.mxu0 0.0
        %809 = vmatprep.subr.mxu0 0.0
        %810 = vmatpush1.msra.mxu0 0.0
        %811 = vmatprep.subr.mxu0 0.0
        %812 = vmatpush1.msra.mxu0 0.0
        %813 = vmatprep.subr.mxu0 0.0
        %814 = vmatpush1.msra.mxu0 0.0
        %815 = vmatprep.subr.mxu0 0.0
        %816 = vmatpush1.msra.mxu0 0.0
        %817 = vmatprep.subr.mxu0 0.0
        %818 = vmatpush1.msra.mxu0 0.0
        %819 = vmatprep.subr.mxu0 0.0
        %820 = vmatpush1.msra.mxu0 0.0
        %821 = vmatprep.subr.mxu0 0.0
        %822 = vmatpush1.msra.mxu0 0.0
        %823 = vmatprep.subr.mxu0 0.0
        %824 = vmatpush1.msra.mxu0 0.0
        %825 = vmatprep.subr.mxu0 0.0
        %826 = vmatpush1.msra.mxu0 0.0
        %827 = vmatprep.subr.mxu0 0.0
        %828 = vmatpush1.msra.mxu0 0.0
        %829 = vmatprep.subr.mxu0 0.0
        %830 = vmatpush1.msra.mxu0 0.0
        %831 = vmatprep.subr.mxu0 0.0
        %832 = vmatpush1.msra.mxu0 0.0
        %833 = vmatprep.subr.mxu0 0.0
        %834 = vmatpush1.msra.mxu0 0.0
        %835 = vmatprep.subr.mxu0 0.0
        %836 = vmatpush1.msra.mxu0 0.0
        %837 = vmatprep.subr.mxu0 0.0
        %838 = vmatpush1.msra.mxu0 0.0
        %839 = vmatprep.mubr.f32.mxu0 0.0
        %840 = vmatmul.mubr.f32.gmra.mrb[0].mxu0 %v773
        %v841 = vpop.f32.mrb[0].mxu0
        %v842 = vadd.f32 0.0, %v841
        %v843 = vpop.f32.mrb[0].mxu0
        %844 = vdwg.mxu0
        %845 = vrot.lane.b32.xlu0 %v678, 120
        %v846 = vpop.permute.xlu0 %845
        %847 = vrot.lane.b32.xlu0 %v671, 88
        %v848 = vpop.permute.xlu0 %847
        %v849 = vsel %vm682, %v846, 0
        %v851 = vsel %vm682, %v848, 0
        %853 = vmatprep.subr.mxu0 0.0
        %854 = vmatpush1.xpose.msra.mxu0 %v851
        %855 = vmatprep.subr.mxu0 0.0
        %856 = vmatpush1.xpose.msra.mxu0 0.0
        %857 = vmatprep.subr.mxu0 0.0
        %858 = vmatpush1.xpose.msra.mxu0 0.0
        %859 = vmatprep.subr.mxu0 0.0
        %860 = vmatpush1.xpose.msra.mxu0 0.0
        %861 = vmatprep.subr.mxu0 0.0
        %862 = vmatpush1.xpose.msra.mxu0 0.0
        %863 = vmatprep.subr.mxu0 0.0
        %864 = vmatpush1.xpose.msra.mxu0 0.0
        %865 = vmatprep.subr.mxu0 0.0
        %866 = vmatpush1.xpose.msra.mxu0 0.0
        %867 = vmatprep.subr.mxu0 0.0
        %868 = vmatpush1.xpose.msra.mxu0 0.0
        %869 = vmatprep.subr.mxu0 0.0
        %870 = vmatpush1.xpose.msra.mxu0 0.0
        %871 = vmatprep.subr.mxu0 0.0
        %872 = vmatpush1.xpose.msra.mxu0 0.0
        %873 = vmatprep.subr.mxu0 0.0
        %874 = vmatpush1.xpose.msra.mxu0 0.0
        %875 = vmatprep.subr.mxu0 0.0
        %876 = vmatpush1.xpose.msra.mxu0 0.0
        %877 = vmatprep.subr.mxu0 0.0
        %878 = vmatpush1.xpose.msra.mxu0 0.0
        %879 = vmatprep.subr.mxu0 0.0
        %880 = vmatpush1.xpose.msra.mxu0 0.0
        %881 = vmatprep.subr.mxu0 0.0
        %882 = vmatpush1.xpose.msra.mxu0 0.0
        %883 = vmatprep.subr.mxu0 0.0
        %884 = vmatpush1.xpose.msra.mxu0 0.0
        %885 = vmatprep.subr.mxu0 0.0
        %886 = vmatpush1.xpose.msra.mxu0 0.0
        %887 = vmatprep.subr.mxu0 0.0
        %888 = vmatpush1.xpose.msra.mxu0 0.0
        %889 = vmatprep.subr.mxu0 0.0
        %890 = vmatpush1.xpose.msra.mxu0 0.0
        %891 = vmatprep.subr.mxu0 0.0
        %892 = vmatpush1.xpose.msra.mxu0 0.0
        %893 = vmatprep.subr.mxu0 0.0
        %894 = vmatpush1.xpose.msra.mxu0 0.0
        %895 = vmatprep.subr.mxu0 0.0
        %896 = vmatpush1.xpose.msra.mxu0 0.0
        %897 = vmatprep.subr.mxu0 0.0
        %898 = vmatpush1.xpose.msra.mxu0 0.0
        %899 = vmatprep.subr.mxu0 0.0
        %900 = vmatpush1.xpose.msra.mxu0 0.0
        %901 = vmatprep.subr.mxu0 0.0
        %902 = vmatpush1.xpose.msra.mxu0 0.0
        %903 = vmatprep.subr.mxu0 0.0
        %904 = vmatpush1.xpose.msra.mxu0 0.0
        %905 = vmatprep.subr.mxu0 0.0
        %906 = vmatpush1.xpose.msra.mxu0 0.0
        %907 = vmatprep.subr.mxu0 0.0
        %908 = vmatpush1.xpose.msra.mxu0 0.0
        %909 = vmatprep.subr.mxu0 0.0
        %910 = vmatpush1.xpose.msra.mxu0 0.0
        %911 = vmatprep.subr.mxu0 0.0
        %912 = vmatpush1.xpose.msra.mxu0 0.0
        %913 = vmatprep.subr.mxu0 0.0
        %914 = vmatpush1.xpose.msra.mxu0 0.0
        %915 = vmatprep.subr.mxu0 0.0
        %916 = vmatpush1.xpose.msra.mxu0 0.0
        %917 = vmatprep.mubr.f32.mxu0 0.0
        %918 = vmatmul.mubr.f32.gmra.mrb[0].mxu0 %v849
        %v919 = vpop.f32.mrb[0].mxu0
        %v920 = vadd.f32 %v588, %v919
        %v921 = vpop.f32.mrb[0].mxu0
        %922 = vdwg.mxu0
        %v923 = vsel %vm682, %v920, -inf
        %924 = vmax.xlane.f32.xlu0 %v923
        %v925 = vpop.xlane.xlu0 %924
        %v926 = vsub.f32 %v920, %v925
        %v927 = vmul.f32 %v926, 1.442695
        %v928 = vpow.pop %v927
        %v929 = vsel %vm682, %v928, 0.0
        %930 = vadd.xlane.f32.xlu0 %v929
        %v931 = vpop.xlane.xlu0 %930
        %v932 = vrcp.pop %v931
        %v933 = vmul.f32 %v928, %v932
        %934 = vrot.lane.b32.xlu0 %v671, 56
        %v935 = vpop.permute.xlu0 %934
        %v938 = vsel %vm682, %v933, 0
        %940 = vmatprep.subr.mxu0 0.0
        %941 = vmatpush1.msra.mxu0 %v935
        %942 = vmatprep.subr.mxu0 0.0
        %943 = vmatpush1.msra.mxu0 0.0
        %944 = vmatprep.subr.mxu0 0.0
        %945 = vmatpush1.msra.mxu0 0.0
        %946 = vmatprep.subr.mxu0 0.0
        %947 = vmatpush1.msra.mxu0 0.0
        %948 = vmatprep.subr.mxu0 0.0
        %949 = vmatpush1.msra.mxu0 0.0
        %950 = vmatprep.subr.mxu0 0.0
        %951 = vmatpush1.msra.mxu0 0.0
        %952 = vmatprep.subr.mxu0 0.0
        %953 = vmatpush1.msra.mxu0 0.0
        %954 = vmatprep.subr.mxu0 0.0
        %955 = vmatpush1.msra.mxu0 0.0
        %956 = vmatprep.subr.mxu0 0.0
        %957 = vmatpush1.msra.mxu0 0.0
        %958 = vmatprep.subr.mxu0 0.0
        %959 = vmatpush1.msra.mxu0 0.0
        %960 = vmatprep.subr.mxu0 0.0
        %961 = vmatpush1.msra.mxu0 0.0
        %962 = vmatprep.subr.mxu0 0.0
        %963 = vmatpush1.msra.mxu0 0.0
        %964 = vmatprep.subr.mxu0 0.0
        %965 = vmatpush1.msra.mxu0 0.0
        %966 = vmatprep.subr.mxu0 0.0
        %967 = vmatpush1.msra.mxu0 0.0
        %968 = vmatprep.subr.mxu0 0.0
        %969 = vmatpush1.msra.mxu0 0.0
        %970 = vmatprep.subr.mxu0 0.0
        %971 = vmatpush1.msra.mxu0 0.0
        %972 = vmatprep.subr.mxu0 0.0
        %973 = vmatpush1.msra.mxu0 0.0
        %974 = vmatprep.subr.mxu0 0.0
        %975 = vmatpush1.msra.mxu0 0.0
        %976 = vmatprep.subr.mxu0 0.0
        %977 = vmatpush1.msra.mxu0 0.0
        %978 = vmatprep.subr.mxu0 0.0
        %979 = vmatpush1.msra.mxu0 0.0
        %980 = vmatprep.subr.mxu0 0.0
        %981 = vmatpush1.msra.mxu0 0.0
        %982 = vmatprep.subr.mxu0 0.0
        %983 = vmatpush1.msra.mxu0 0.0
        %984 = vmatprep.subr.mxu0 0.0
        %985 = vmatpush1.msra.mxu0 0.0
        %986 = vmatprep.subr.mxu0 0.0
        %987 = vmatpush1.msra.mxu0 0.0
        %988 = vmatprep.subr.mxu0 0.0
        %989 = vmatpush1.msra.mxu0 0.0
        %990 = vmatprep.subr.mxu0 0.0
        %991 = vmatpush1.msra.mxu0 0.0
        %992 = vmatprep.subr.mxu0 0.0
        %993 = vmatpush1.msra.mxu0 0.0
        %994 = vmatprep.subr.mxu0 0.0
        %995 = vmatpush1.msra.mxu0 0.0
        %996 = vmatprep.subr.mxu0 0.0
        %997 = vmatpush1.msra.mxu0 0.0
        %998 = vmatprep.subr.mxu0 0.0
        %999 = vmatpush1.msra.mxu0 0.0
        %1000 = vmatprep.subr.mxu0 0.0
        %1001 = vmatpush1.msra.mxu0 0.0
        %1002 = vmatprep.subr.mxu0 0.0
        %1003 = vmatpush1.msra.mxu0 0.0
        %1004 = vmatprep.mubr.f32.mxu0 0.0
        %1005 = vmatmul.mubr.f32.gmra.mrb[0].mxu0 %v938
        %v1006 = vpop.f32.mrb[0].mxu0
        %v1007 = vadd.f32 0.0, %v1006
        %v1008 = vpop.f32.mrb[0].mxu0
        %1009 = vdwg.mxu0
        %v1011 = vsel %vm682, %v1007, 0
        %1013 = vmatprep.subr.mxu0 0.0
        %1014 = vmatpush1.msra.mxu0 %v675
        %1015 = vmatprep.subr.mxu0 0.0
        %1016 = vmatpush1.msra.mxu0 0.0
        %1017 = vmatprep.subr.mxu0 0.0
        %1018 = vmatpush1.msra.mxu0 0.0
        %1019 = vmatprep.subr.mxu0 0.0
        %1020 = vmatpush1.msra.mxu0 0.0
        %1021 = vmatprep.subr.mxu0 0.0
        %1022 = vmatpush1.msra.mxu0 0.0
        %1023 = vmatprep.subr.mxu0 0.0
        %1024 = vmatpush1.msra.mxu0 0.0
        %1025 = vmatprep.subr.mxu0 0.0
        %1026 = vmatpush1.msra.mxu0 0.0
        %1027 = vmatprep.subr.mxu0 0.0
        %1028 = vmatpush1.msra.mxu0 0.0
        %1029 = vmatprep.subr.mxu0 0.0
        %1030 = vmatpush1.msra.mxu0 0.0
        %1031 = vmatprep.subr.mxu0 0.0
        %1032 = vmatpush1.msra.mxu0 0.0
        %1033 = vmatprep.subr.mxu0 0.0
        %1034 = vmatpush1.msra.mxu0 0.0
        %1035 = vmatprep.subr.mxu0 0.0
        %1036 = vmatpush1.msra.mxu0 0.0
        %1037 = vmatprep.subr.mxu0 0.0
        %1038 = vmatpush1.msra.mxu0 0.0
        %1039 = vmatprep.subr.mxu0 0.0
        %1040 = vmatpush1.msra.mxu0 0.0
        %1041 = vmatprep.subr.mxu0 0.0
        %1042 = vmatpush1.msra.mxu0 0.0
        %1043 = vmatprep.subr.mxu0 0.0
        %1044 = vmatpush1.msra.mxu0 0.0
        %1045 = vmatprep.subr.mxu0 0.0
        %1046 = vmatpush1.msra.mxu0 0.0
        %1047 = vmatprep.subr.mxu0 0.0
        %1048 = vmatpush1.msra.mxu0 0.0
        %1049 = vmatprep.subr.mxu0 0.0
        %1050 = vmatpush1.msra.mxu0 0.0
        %1051 = vmatprep.subr.mxu0 0.0
        %1052 = vmatpush1.msra.mxu0 0.0
        %1053 = vmatprep.subr.mxu0 0.0
        %1054 = vmatpush1.msra.mxu0 0.0
        %1055 = vmatprep.subr.mxu0 0.0
        %1056 = vmatpush1.msra.mxu0 0.0
        %1057 = vmatprep.subr.mxu0 0.0
        %1058 = vmatpush1.msra.mxu0 0.0
        %1059 = vmatprep.subr.mxu0 0.0
        %1060 = vmatpush1.msra.mxu0 0.0
        %1061 = vmatprep.subr.mxu0 0.0
        %1062 = vmatpush1.msra.mxu0 0.0
        %1063 = vmatprep.subr.mxu0 0.0
        %1064 = vmatpush1.msra.mxu0 0.0
        %1065 = vmatprep.subr.mxu0 0.0
        %1066 = vmatpush1.msra.mxu0 0.0
        %1067 = vmatprep.subr.mxu0 0.0
        %1068 = vmatpush1.msra.mxu0 0.0
        %1069 = vmatprep.subr.mxu0 0.0
        %1070 = vmatpush1.msra.mxu0 0.0
        %1071 = vmatprep.subr.mxu0 0.0
        %1072 = vmatpush1.msra.mxu0 0.0
        %1073 = vmatprep.subr.mxu0 0.0
        %1074 = vmatpush1.msra.mxu0 0.0
        %1075 = vmatprep.subr.mxu0 0.0
        %1076 = vmatpush1.msra.mxu0 0.0
        %1077 = vmatprep.mubr.f32.mxu0 0.0
        %1078 = vmatmul.mubr.f32.gmra.mrb[0].mxu0 %v1011
        %v1079 = vpop.f32.mrb[0].mxu0
        %v1080 = vadd.f32 0.0, %v1079
        %v1081 = vpop.f32.mrb[0].mxu0
        %1082 = vdwg.mxu0
        %v1084 = vsel %vm682, %v842, 0
        %1086 = vmatprep.subr.mxu0 0.0
        %1087 = vmatpush1.msra.mxu0 %v674
        %1088 = vmatprep.subr.mxu0 0.0
        %1089 = vmatpush1.msra.mxu0 0.0
        %1090 = vmatprep.subr.mxu0 0.0
        %1091 = vmatpush1.msra.mxu0 0.0
        %1092 = vmatprep.subr.mxu0 0.0
        %1093 = vmatpush1.msra.mxu0 0.0
        %1094 = vmatprep.subr.mxu0 0.0
        %1095 = vmatpush1.msra.mxu0 0.0
        %1096 = vmatprep.subr.mxu0 0.0
        %1097 = vmatpush1.msra.mxu0 0.0
        %1098 = vmatprep.subr.mxu0 0.0
        %1099 = vmatpush1.msra.mxu0 0.0
        %1100 = vmatprep.subr.mxu0 0.0
        %1101 = vmatpush1.msra.mxu0 0.0
        %1102 = vmatprep.subr.mxu0 0.0
        %1103 = vmatpush1.msra.mxu0 0.0
        %1104 = vmatprep.subr.mxu0 0.0
        %1105 = vmatpush1.msra.mxu0 0.0
        %1106 = vmatprep.subr.mxu0 0.0
        %1107 = vmatpush1.msra.mxu0 0.0
        %1108 = vmatprep.subr.mxu0 0.0
        %1109 = vmatpush1.msra.mxu0 0.0
        %1110 = vmatprep.subr.mxu0 0.0
        %1111 = vmatpush1.msra.mxu0 0.0
        %1112 = vmatprep.subr.mxu0 0.0
        %1113 = vmatpush1.msra.mxu0 0.0
        %1114 = vmatprep.subr.mxu0 0.0
        %1115 = vmatpush1.msra.mxu0 0.0
        %1116 = vmatprep.subr.mxu0 0.0
        %1117 = vmatpush1.msra.mxu0 0.0
        %1118 = vmatprep.subr.mxu0 0.0
        %1119 = vmatpush1.msra.mxu0 0.0
        %1120 = vmatprep.subr.mxu0 0.0
        %1121 = vmatpush1.msra.mxu0 0.0
        %1122 = vmatprep.subr.mxu0 0.0
        %1123 = vmatpush1.msra.mxu0 0.0
        %1124 = vmatprep.subr.mxu0 0.0
        %1125 = vmatpush1.msra.mxu0 0.0
        %1126 = vmatprep.subr.mxu0 0.0
        %1127 = vmatpush1.msra.mxu0 0.0
        %1128 = vmatprep.subr.mxu0 0.0
        %1129 = vmatpush1.msra.mxu0 0.0
        %1130 = vmatprep.subr.mxu0 0.0
        %1131 = vmatpush1.msra.mxu0 0.0
        %1132 = vmatprep.subr.mxu0 0.0
        %1133 = vmatpush1.msra.mxu0 0.0
        %1134 = vmatprep.subr.mxu0 0.0
        %1135 = vmatpush1.msra.mxu0 0.0
        %1136 = vmatprep.subr.mxu0 0.0
        %1137 = vmatpush1.msra.mxu0 0.0
        %1138 = vmatprep.subr.mxu0 0.0
        %1139 = vmatpush1.msra.mxu0 0.0
        %1140 = vmatprep.subr.mxu0 0.0
        %1141 = vmatpush1.msra.mxu0 0.0
        %1142 = vmatprep.subr.mxu0 0.0
        %1143 = vmatpush1.msra.mxu0 0.0
        %1144 = vmatprep.subr.mxu0 0.0
        %1145 = vmatpush1.msra.mxu0 0.0
        %1146 = vmatprep.subr.mxu0 0.0
        %1147 = vmatpush1.msra.mxu0 0.0
        %1148 = vmatprep.subr.mxu0 0.0
        %1149 = vmatpush1.msra.mxu0 0.0
        %1150 = vmatprep.mubr.f32.mxu0 0.0
        %1151 = vmatmul.mubr.f32.gmra.mrb[0].mxu0 %v1084
        %v1152 = vpop.f32.mrb[0].mxu0
        %v1153 = vadd.f32 %v1080, %v1152
        %v1154 = vpop.f32.mrb[0].mxu0
        %1155 = vdwg.mxu0
        %1156 = vrot.lane.b32.xlu0 %v678, 112
        %v1157 = vpop.permute.xlu0 %1156
        %1158 = vrot.lane.b32.xlu0 %v671, 80
        %v1159 = vpop.permute.xlu0 %1158
        %v1160 = vsel %vm682, %v1157, 0
        %v1162 = vsel %vm682, %v1159, 0
        %1164 = vmatprep.subr.mxu0 0.0
        %1165 = vmatpush1.xpose.msra.mxu0 %v1162
        %1166 = vmatprep.subr.mxu0 0.0
        %1167 = vmatpush1.xpose.msra.mxu0 0.0
        %1168 = vmatprep.subr.mxu0 0.0
        %1169 = vmatpush1.xpose.msra.mxu0 0.0
        %1170 = vmatprep.subr.mxu0 0.0
        %1171 = vmatpush1.xpose.msra.mxu0 0.0
        %1172 = vmatprep.subr.mxu0 0.0
        %1173 = vmatpush1.xpose.msra.mxu0 0.0
        %1174 = vmatprep.subr.mxu0 0.0
        %1175 = vmatpush1.xpose.msra.mxu0 0.0
        %1176 = vmatprep.subr.mxu0 0.0
        %1177 = vmatpush1.xpose.msra.mxu0 0.0
        %1178 = vmatprep.subr.mxu0 0.0
        %1179 = vmatpush1.xpose.msra.mxu0 0.0
        %1180 = vmatprep.subr.mxu0 0.0
        %1181 = vmatpush1.xpose.msra.mxu0 0.0
        %1182 = vmatprep.subr.mxu0 0.0
        %1183 = vmatpush1.xpose.msra.mxu0 0.0
        %1184 = vmatprep.subr.mxu0 0.0
        %1185 = vmatpush1.xpose.msra.mxu0 0.0
        %1186 = vmatprep.subr.mxu0 0.0
        %1187 = vmatpush1.xpose.msra.mxu0 0.0
        %1188 = vmatprep.subr.mxu0 0.0
        %1189 = vmatpush1.xpose.msra.mxu0 0.0
        %1190 = vmatprep.subr.mxu0 0.0
        %1191 = vmatpush1.xpose.msra.mxu0 0.0
        %1192 = vmatprep.subr.mxu0 0.0
        %1193 = vmatpush1.xpose.msra.mxu0 0.0
        %1194 = vmatprep.subr.mxu0 0.0
        %1195 = vmatpush1.xpose.msra.mxu0 0.0
        %1196 = vmatprep.subr.mxu0 0.0
        %1197 = vmatpush1.xpose.msra.mxu0 0.0
        %1198 = vmatprep.subr.mxu0 0.0
        %1199 = vmatpush1.xpose.msra.mxu0 0.0
        %1200 = vmatprep.subr.mxu0 0.0
        %1201 = vmatpush1.xpose.msra.mxu0 0.0
        %1202 = vmatprep.subr.mxu0 0.0
        %1203 = vmatpush1.xpose.msra.mxu0 0.0
        %1204 = vmatprep.subr.mxu0 0.0
        %1205 = vmatpush1.xpose.msra.mxu0 0.0
        %1206 = vmatprep.subr.mxu0 0.0
        %1207 = vmatpush1.xpose.msra.mxu0 0.0
        %1208 = vmatprep.subr.mxu0 0.0
        %1209 = vmatpush1.xpose.msra.mxu0 0.0
        %1210 = vmatprep.subr.mxu0 0.0
        %1211 = vmatpush1.xpose.msra.mxu0 0.0
        %1212 = vmatprep.subr.mxu0 0.0
        %1213 = vmatpush1.xpose.msra.mxu0 0.0
        %1214 = vmatprep.subr.mxu0 0.0
        %1215 = vmatpush1.xpose.msra.mxu0 0.0
        %1216 = vmatprep.subr.mxu0 0.0
        %1217 = vmatpush1.xpose.msra.mxu0 0.0
        %1218 = vmatprep.subr.mxu0 0.0
        %1219 = vmatpush1.xpose.msra.mxu0 0.0
        %1220 = vmatprep.subr.mxu0 0.0
        %1221 = vmatpush1.xpose.msra.mxu0 0.0
        %1222 = vmatprep.subr.mxu0 0.0
        %1223 = vmatpush1.xpose.msra.mxu0 0.0
        %1224 = vmatprep.subr.mxu0 0.0
        %1225 = vmatpush1.xpose.msra.mxu0 0.0
        %1226 = vmatprep.subr.mxu0 0.0
        %1227 = vmatpush1.xpose.msra.mxu0 0.0
        %1228 = vmatprep.mubr.f32.mxu0 0.0
        %1229 = vmatmul.mubr.f32.gmra.mrb[0].mxu0 %v1160
        %v1230 = vpop.f32.mrb[0].mxu0
        %v1231 = vadd.f32 %v588, %v1230
        %v1232 = vpop.f32.mrb[0].mxu0
        %1233 = vdwg.mxu0
        %v1234 = vsel %vm682, %v1231, -inf
        %1235 = vmax.xlane.f32.xlu0 %v1234
        %v1236 = vpop.xlane.xlu0 %1235
        %v1237 = vsub.f32 %v1231, %v1236
        %v1238 = vmul.f32 %v1237, 1.442695
        %v1239 = vpow.pop %v1238
        %v1240 = vsel %vm682, %v1239, 0.0
        %1241 = vadd.xlane.f32.xlu0 %v1240
        %v1242 = vpop.xlane.xlu0 %1241
        %v1243 = vrcp.pop %v1242
        %v1244 = vmul.f32 %v1239, %v1243
        %1245 = vrot.lane.b32.xlu0 %v671, 48
        %v1246 = vpop.permute.xlu0 %1245
        %v1249 = vsel %vm682, %v1244, 0
        %1251 = vmatprep.subr.mxu0 0.0
        %1252 = vmatpush1.msra.mxu0 %v1246
        %1253 = vmatprep.subr.mxu0 0.0
        %1254 = vmatpush1.msra.mxu0 0.0
        %1255 = vmatprep.subr.mxu0 0.0
        %1256 = vmatpush1.msra.mxu0 0.0
        %1257 = vmatprep.subr.mxu0 0.0
        %1258 = vmatpush1.msra.mxu0 0.0
        %1259 = vmatprep.subr.mxu0 0.0
        %1260 = vmatpush1.msra.mxu0 0.0
        %1261 = vmatprep.subr.mxu0 0.0
        %1262 = vmatpush1.msra.mxu0 0.0
        %1263 = vmatprep.subr.mxu0 0.0
        %1264 = vmatpush1.msra.mxu0 0.0
        %1265 = vmatprep.subr.mxu0 0.0
        %1266 = vmatpush1.msra.mxu0 0.0
        %1267 = vmatprep.subr.mxu0 0.0
        %1268 = vmatpush1.msra.mxu0 0.0
        %1269 = vmatprep.subr.mxu0 0.0
        %1270 = vmatpush1.msra.mxu0 0.0
        %1271 = vmatprep.subr.mxu0 0.0
        %1272 = vmatpush1.msra.mxu0 0.0
        %1273 = vmatprep.subr.mxu0 0.0
        %1274 = vmatpush1.msra.mxu0 0.0
        %1275 = vmatprep.subr.mxu0 0.0
        %1276 = vmatpush1.msra.mxu0 0.0
        %1277 = vmatprep.subr.mxu0 0.0
        %1278 = vmatpush1.msra.mxu0 0.0
        %1279 = vmatprep.subr.mxu0 0.0
        %1280 = vmatpush1.msra.mxu0 0.0
        %1281 = vmatprep.subr.mxu0 0.0
        %1282 = vmatpush1.msra.mxu0 0.0
        %1283 = vmatprep.subr.mxu0 0.0
        %1284 = vmatpush1.msra.mxu0 0.0
        %1285 = vmatprep.subr.mxu0 0.0
        %1286 = vmatpush1.msra.mxu0 0.0
        %1287 = vmatprep.subr.mxu0 0.0
        %1288 = vmatpush1.msra.mxu0 0.0
        %1289 = vmatprep.subr.mxu0 0.0
        %1290 = vmatpush1.msra.mxu0 0.0
        %1291 = vmatprep.subr.mxu0 0.0
        %1292 = vmatpush1.msra.mxu0 0.0
        %1293 = vmatprep.subr.mxu0 0.0
        %1294 = vmatpush1.msra.mxu0 0.0
        %1295 = vmatprep.subr.mxu0 0.0
        %1296 = vmatpush1.msra.mxu0 0.0
        %1297 = vmatprep.subr.mxu0 0.0
        %1298 = vmatpush1.msra.mxu0 0.0
        %1299 = vmatprep.subr.mxu0 0.0
        %1300 = vmatpush1.msra.mxu0 0.0
        %1301 = vmatprep.subr.mxu0 0.0
        %1302 = vmatpush1.msra.mxu0 0.0
        %1303 = vmatprep.subr.mxu0 0.0
        %1304 = vmatpush1.msra.mxu0 0.0
        %1305 = vmatprep.subr.mxu0 0.0
        %1306 = vmatpush1.msra.mxu0 0.0
        %1307 = vmatprep.subr.mxu0 0.0
        %1308 = vmatpush1.msra.mxu0 0.0
        %1309 = vmatprep.subr.mxu0 0.0
        %1310 = vmatpush1.msra.mxu0 0.0
        %1311 = vmatprep.subr.mxu0 0.0
        %1312 = vmatpush1.msra.mxu0 0.0
        %1313 = vmatprep.subr.mxu0 0.0
        %1314 = vmatpush1.msra.mxu0 0.0
        %1315 = vmatprep.mubr.f32.mxu0 0.0
        %1316 = vmatmul.mubr.f32.gmra.mrb[0].mxu0 %v1249
        %v1317 = vpop.f32.mrb[0].mxu0
        %v1318 = vadd.f32 0.0, %v1317
        %v1319 = vpop.f32.mrb[0].mxu0
        %1320 = vdwg.mxu0
        %v1322 = vsel %vm682, %v1318, 0
        %1324 = vmatprep.subr.mxu0 0.0
        %1325 = vmatpush1.msra.mxu0 %v676
        %1326 = vmatprep.subr.mxu0 0.0
        %1327 = vmatpush1.msra.mxu0 0.0
        %1328 = vmatprep.subr.mxu0 0.0
        %1329 = vmatpush1.msra.mxu0 0.0
        %1330 = vmatprep.subr.mxu0 0.0
        %1331 = vmatpush1.msra.mxu0 0.0
        %1332 = vmatprep.subr.mxu0 0.0
        %1333 = vmatpush1.msra.mxu0 0.0
        %1334 = vmatprep.subr.mxu0 0.0
        %1335 = vmatpush1.msra.mxu0 0.0
        %1336 = vmatprep.subr.mxu0 0.0
        %1337 = vmatpush1.msra.mxu0 0.0
        %1338 = vmatprep.subr.mxu0 0.0
        %1339 = vmatpush1.msra.mxu0 0.0
        %1340 = vmatprep.subr.mxu0 0.0
        %1341 = vmatpush1.msra.mxu0 0.0
        %1342 = vmatprep.subr.mxu0 0.0
        %1343 = vmatpush1.msra.mxu0 0.0
        %1344 = vmatprep.subr.mxu0 0.0
        %1345 = vmatpush1.msra.mxu0 0.0
        %1346 = vmatprep.subr.mxu0 0.0
        %1347 = vmatpush1.msra.mxu0 0.0
        %1348 = vmatprep.subr.mxu0 0.0
        %1349 = vmatpush1.msra.mxu0 0.0
        %1350 = vmatprep.subr.mxu0 0.0
        %1351 = vmatpush1.msra.mxu0 0.0
        %1352 = vmatprep.subr.mxu0 0.0
        %1353 = vmatpush1.msra.mxu0 0.0
        %1354 = vmatprep.subr.mxu0 0.0
        %1355 = vmatpush1.msra.mxu0 0.0
        %1356 = vmatprep.subr.mxu0 0.0
        %1357 = vmatpush1.msra.mxu0 0.0
        %1358 = vmatprep.subr.mxu0 0.0
        %1359 = vmatpush1.msra.mxu0 0.0
        %1360 = vmatprep.subr.mxu0 0.0
        %1361 = vmatpush1.msra.mxu0 0.0
        %1362 = vmatprep.subr.mxu0 0.0
        %1363 = vmatpush1.msra.mxu0 0.0
        %1364 = vmatprep.subr.mxu0 0.0
        %1365 = vmatpush1.msra.mxu0 0.0
        %1366 = vmatprep.subr.mxu0 0.0
        %1367 = vmatpush1.msra.mxu0 0.0
        %1368 = vmatprep.subr.mxu0 0.0
        %1369 = vmatpush1.msra.mxu0 0.0
        %1370 = vmatprep.subr.mxu0 0.0
        %1371 = vmatpush1.msra.mxu0 0.0
        %1372 = vmatprep.subr.mxu0 0.0
        %1373 = vmatpush1.msra.mxu0 0.0
        %1374 = vmatprep.subr.mxu0 0.0
        %1375 = vmatpush1.msra.mxu0 0.0
        %1376 = vmatprep.subr.mxu0 0.0
        %1377 = vmatpush1.msra.mxu0 0.0
        %1378 = vmatprep.subr.mxu0 0.0
        %1379 = vmatpush1.msra.mxu0 0.0
        %1380 = vmatprep.subr.mxu0 0.0
        %1381 = vmatpush1.msra.mxu0 0.0
        %1382 = vmatprep.subr.mxu0 0.0
        %1383 = vmatpush1.msra.mxu0 0.0
        %1384 = vmatprep.subr.mxu0 0.0
        %1385 = vmatpush1.msra.mxu0 0.0
        %1386 = vmatprep.subr.mxu0 0.0
        %1387 = vmatpush1.msra.mxu0 0.0
        %1388 = vmatprep.mubr.f32.mxu0 0.0
        %1389 = vmatmul.mubr.f32.gmra.mrb[0].mxu0 %v1322
        %v1390 = vpop.f32.mrb[0].mxu0
        %v1391 = vadd.f32 0.0, %v1390
        %v1392 = vpop.f32.mrb[0].mxu0
        %1393 = vdwg.mxu0
        %v1394 = vadd.f32 %v1153, %v1391
        %1395 = vrot.lane.b32.xlu0 %v678, 104
        %v1396 = vpop.permute.xlu0 %1395
        %1397 = vrot.lane.b32.xlu0 %v671, 72
        %v1398 = vpop.permute.xlu0 %1397
        %v1399 = vsel %vm682, %v1396, 0
        %v1401 = vsel %vm682, %v1398, 0
        %1403 = vmatprep.subr.mxu0 0.0
        %1404 = vmatpush1.xpose.msra.mxu0 %v1401
        %1405 = vmatprep.subr.mxu0 0.0
        %1406 = vmatpush1.xpose.msra.mxu0 0.0
        %1407 = vmatprep.subr.mxu0 0.0
        %1408 = vmatpush1.xpose.msra.mxu0 0.0
        %1409 = vmatprep.subr.mxu0 0.0
        %1410 = vmatpush1.xpose.msra.mxu0 0.0
        %1411 = vmatprep.subr.mxu0 0.0
        %1412 = vmatpush1.xpose.msra.mxu0 0.0
        %1413 = vmatprep.subr.mxu0 0.0
        %1414 = vmatpush1.xpose.msra.mxu0 0.0
        %1415 = vmatprep.subr.mxu0 0.0
        %1416 = vmatpush1.xpose.msra.mxu0 0.0
        %1417 = vmatprep.subr.mxu0 0.0
        %1418 = vmatpush1.xpose.msra.mxu0 0.0
        %1419 = vmatprep.subr.mxu0 0.0
        %1420 = vmatpush1.xpose.msra.mxu0 0.0
        %1421 = vmatprep.subr.mxu0 0.0
        %1422 = vmatpush1.xpose.msra.mxu0 0.0
        %1423 = vmatprep.subr.mxu0 0.0
        %1424 = vmatpush1.xpose.msra.mxu0 0.0
        %1425 = vmatprep.subr.mxu0 0.0
        %1426 = vmatpush1.xpose.msra.mxu0 0.0
        %1427 = vmatprep.subr.mxu0 0.0
        %1428 = vmatpush1.xpose.msra.mxu0 0.0
        %1429 = vmatprep.subr.mxu0 0.0
        %1430 = vmatpush1.xpose.msra.mxu0 0.0
        %1431 = vmatprep.subr.mxu0 0.0
        %1432 = vmatpush1.xpose.msra.mxu0 0.0
        %1433 = vmatprep.subr.mxu0 0.0
        %1434 = vmatpush1.xpose.msra.mxu0 0.0
        %1435 = vmatprep.subr.mxu0 0.0
        %1436 = vmatpush1.xpose.msra.mxu0 0.0
        %1437 = vmatprep.subr.mxu0 0.0
        %1438 = vmatpush1.xpose.msra.mxu0 0.0
        %1439 = vmatprep.subr.mxu0 0.0
        %1440 = vmatpush1.xpose.msra.mxu0 0.0
        %1441 = vmatprep.subr.mxu0 0.0
        %1442 = vmatpush1.xpose.msra.mxu0 0.0
        %1443 = vmatprep.subr.mxu0 0.0
        %1444 = vmatpush1.xpose.msra.mxu0 0.0
        %1445 = vmatprep.subr.mxu0 0.0
        %1446 = vmatpush1.xpose.msra.mxu0 0.0
        %1447 = vmatprep.subr.mxu0 0.0
        %1448 = vmatpush1.xpose.msra.mxu0 0.0
        %1449 = vmatprep.subr.mxu0 0.0
        %1450 = vmatpush1.xpose.msra.mxu0 0.0
        %1451 = vmatprep.subr.mxu0 0.0
        %1452 = vmatpush1.xpose.msra.mxu0 0.0
        %1453 = vmatprep.subr.mxu0 0.0
        %1454 = vmatpush1.xpose.msra.mxu0 0.0
        %1455 = vmatprep.subr.mxu0 0.0
        %1456 = vmatpush1.xpose.msra.mxu0 0.0
        %1457 = vmatprep.subr.mxu0 0.0
        %1458 = vmatpush1.xpose.msra.mxu0 0.0
        %1459 = vmatprep.subr.mxu0 0.0
        %1460 = vmatpush1.xpose.msra.mxu0 0.0
        %1461 = vmatprep.subr.mxu0 0.0
        %1462 = vmatpush1.xpose.msra.mxu0 0.0
        %1463 = vmatprep.subr.mxu0 0.0
        %1464 = vmatpush1.xpose.msra.mxu0 0.0
        %1465 = vmatprep.subr.mxu0 0.0
        %1466 = vmatpush1.xpose.msra.mxu0 0.0
        %1467 = vmatprep.mubr.f32.mxu0 0.0
        %1468 = vmatmul.mubr.f32.gmra.mrb[0].mxu0 %v1399
        %v1469 = vpop.f32.mrb[0].mxu0
        %v1470 = vadd.f32 %v588, %v1469
        %v1471 = vpop.f32.mrb[0].mxu0
        %1472 = vdwg.mxu0
        %v1473 = vsel %vm682, %v1470, -inf
        %1474 = vmax.xlane.f32.xlu0 %v1473
        %v1475 = vpop.xlane.xlu0 %1474
        %v1476 = vsub.f32 %v1470, %v1475
        %v1477 = vmul.f32 %v1476, 1.442695
        %v1478 = vpow.pop %v1477
        %v1479 = vsel %vm682, %v1478, 0.0
        %1480 = vadd.xlane.f32.xlu0 %v1479
        %v1481 = vpop.xlane.xlu0 %1480
        %v1482 = vrcp.pop %v1481
        %v1483 = vmul.f32 %v1478, %v1482
        %1484 = vrot.lane.b32.xlu0 %v671, 40
        %v1485 = vpop.permute.xlu0 %1484
        %v1488 = vsel %vm682, %v1483, 0
        %1490 = vmatprep.subr.mxu0 0.0
        %1491 = vmatpush1.msra.mxu0 %v1485
        %1492 = vmatprep.subr.mxu0 0.0
        %1493 = vmatpush1.msra.mxu0 0.0
        %1494 = vmatprep.subr.mxu0 0.0
        %1495 = vmatpush1.msra.mxu0 0.0
        %1496 = vmatprep.subr.mxu0 0.0
        %1497 = vmatpush1.msra.mxu0 0.0
        %1498 = vmatprep.subr.mxu0 0.0
        %1499 = vmatpush1.msra.mxu0 0.0
        %1500 = vmatprep.subr.mxu0 0.0
        %1501 = vmatpush1.msra.mxu0 0.0
        %1502 = vmatprep.subr.mxu0 0.0
        %1503 = vmatpush1.msra.mxu0 0.0
        %1504 = vmatprep.subr.mxu0 0.0
        %1505 = vmatpush1.msra.mxu0 0.0
        %1506 = vmatprep.subr.mxu0 0.0
        %1507 = vmatpush1.msra.mxu0 0.0
        %1508 = vmatprep.subr.mxu0 0.0
        %1509 = vmatpush1.msra.mxu0 0.0
        %1510 = vmatprep.subr.mxu0 0.0
        %1511 = vmatpush1.msra.mxu0 0.0
        %1512 = vmatprep.subr.mxu0 0.0
        %1513 = vmatpush1.msra.mxu0 0.0
        %1514 = vmatprep.subr.mxu0 0.0
        %1515 = vmatpush1.msra.mxu0 0.0
        %1516 = vmatprep.subr.mxu0 0.0
        %1517 = vmatpush1.msra.mxu0 0.0
        %1518 = vmatprep.subr.mxu0 0.0
        %1519 = vmatpush1.msra.mxu0 0.0
        %1520 = vmatprep.subr.mxu0 0.0
        %1521 = vmatpush1.msra.mxu0 0.0
        %1522 = vmatprep.subr.mxu0 0.0
        %1523 = vmatpush1.msra.mxu0 0.0
        %1524 = vmatprep.subr.mxu0 0.0
        %1525 = vmatpush1.msra.mxu0 0.0
        %1526 = vmatprep.subr.mxu0 0.0
        %1527 = vmatpush1.msra.mxu0 0.0
        %1528 = vmatprep.subr.mxu0 0.0
        %1529 = vmatpush1.msra.mxu0 0.0
        %1530 = vmatprep.subr.mxu0 0.0
        %1531 = vmatpush1.msra.mxu0 0.0
        %1532 = vmatprep.subr.mxu0 0.0
        %1533 = vmatpush1.msra.mxu0 0.0
        %1534 = vmatprep.subr.mxu0 0.0
        %1535 = vmatpush1.msra.mxu0 0.0
        %1536 = vmatprep.subr.mxu0 0.0
        %1537 = vmatpush1.msra.mxu0 0.0
        %1538 = vmatprep.subr.mxu0 0.0
        %1539 = vmatpush1.msra.mxu0 0.0
        %1540 = vmatprep.subr.mxu0 0.0
        %1541 = vmatpush1.msra.mxu0 0.0
        %1542 = vmatprep.subr.mxu0 0.0
        %1543 = vmatpush1.msra.mxu0 0.0
        %1544 = vmatprep.subr.mxu0 0.0
        %1545 = vmatpush1.msra.mxu0 0.0
        %1546 = vmatprep.subr.mxu0 0.0
        %1547 = vmatpush1.msra.mxu0 0.0
        %1548 = vmatprep.subr.mxu0 0.0
        %1549 = vmatpush1.msra.mxu0 0.0
        %1550 = vmatprep.subr.mxu0 0.0
        %1551 = vmatpush1.msra.mxu0 0.0
        %1552 = vmatprep.subr.mxu0 0.0
        %1553 = vmatpush1.msra.mxu0 0.0
        %1554 = vmatprep.mubr.f32.mxu0 0.0
        %1555 = vmatmul.mubr.f32.gmra.mrb[0].mxu0 %v1488
        %v1556 = vpop.f32.mrb[0].mxu0
        %v1557 = vadd.f32 0.0, %v1556
        %v1558 = vpop.f32.mrb[0].mxu0
        %1559 = vdwg.mxu0
        %v1561 = vsel %vm682, %v1557, 0
        %1563 = vmatprep.subr.mxu0 0.0
        %1564 = vmatpush1.msra.mxu0 %v677
        %1565 = vmatprep.subr.mxu0 0.0
        %1566 = vmatpush1.msra.mxu0 0.0
        %1567 = vmatprep.subr.mxu0 0.0
        %1568 = vmatpush1.msra.mxu0 0.0
        %1569 = vmatprep.subr.mxu0 0.0
        %1570 = vmatpush1.msra.mxu0 0.0
        %1571 = vmatprep.subr.mxu0 0.0
        %1572 = vmatpush1.msra.mxu0 0.0
        %1573 = vmatprep.subr.mxu0 0.0
        %1574 = vmatpush1.msra.mxu0 0.0
        %1575 = vmatprep.subr.mxu0 0.0
        %1576 = vmatpush1.msra.mxu0 0.0
        %1577 = vmatprep.subr.mxu0 0.0
        %1578 = vmatpush1.msra.mxu0 0.0
        %1579 = vmatprep.subr.mxu0 0.0
        %1580 = vmatpush1.msra.mxu0 0.0
        %1581 = vmatprep.subr.mxu0 0.0
        %1582 = vmatpush1.msra.mxu0 0.0
        %1583 = vmatprep.subr.mxu0 0.0
        %1584 = vmatpush1.msra.mxu0 0.0
        %1585 = vmatprep.subr.mxu0 0.0
        %1586 = vmatpush1.msra.mxu0 0.0
        %1587 = vmatprep.subr.mxu0 0.0
        %1588 = vmatpush1.msra.mxu0 0.0
        %1589 = vmatprep.subr.mxu0 0.0
        %1590 = vmatpush1.msra.mxu0 0.0
        %1591 = vmatprep.subr.mxu0 0.0
        %1592 = vmatpush1.msra.mxu0 0.0
        %1593 = vmatprep.subr.mxu0 0.0
        %1594 = vmatpush1.msra.mxu0 0.0
        %1595 = vmatprep.subr.mxu0 0.0
        %1596 = vmatpush1.msra.mxu0 0.0
        %1597 = vmatprep.subr.mxu0 0.0
        %1598 = vmatpush1.msra.mxu0 0.0
        %1599 = vmatprep.subr.mxu0 0.0
        %1600 = vmatpush1.msra.mxu0 0.0
        %1601 = vmatprep.subr.mxu0 0.0
        %1602 = vmatpush1.msra.mxu0 0.0
        %1603 = vmatprep.subr.mxu0 0.0
        %1604 = vmatpush1.msra.mxu0 0.0
        %1605 = vmatprep.subr.mxu0 0.0
        %1606 = vmatpush1.msra.mxu0 0.0
        %1607 = vmatprep.subr.mxu0 0.0
        %1608 = vmatpush1.msra.mxu0 0.0
        %1609 = vmatprep.subr.mxu0 0.0
        %1610 = vmatpush1.msra.mxu0 0.0
        %1611 = vmatprep.subr.mxu0 0.0
        %1612 = vmatpush1.msra.mxu0 0.0
        %1613 = vmatprep.subr.mxu0 0.0
        %1614 = vmatpush1.msra.mxu0 0.0
        %1615 = vmatprep.subr.mxu0 0.0
        %1616 = vmatpush1.msra.mxu0 0.0
        %1617 = vmatprep.subr.mxu0 0.0
        %1618 = vmatpush1.msra.mxu0 0.0
        %1619 = vmatprep.subr.mxu0 0.0
        %1620 = vmatpush1.msra.mxu0 0.0
        %1621 = vmatprep.subr.mxu0 0.0
        %1622 = vmatpush1.msra.mxu0 0.0
        %1623 = vmatprep.subr.mxu0 0.0
        %1624 = vmatpush1.msra.mxu0 0.0
        %1625 = vmatprep.subr.mxu0 0.0
        %1626 = vmatpush1.msra.mxu0 0.0
        %1627 = vmatprep.mubr.f32.mxu0 0.0
        %1628 = vmatmul.mubr.f32.gmra.mrb[0].mxu0 %v1561
        %v1629 = vpop.f32.mrb[0].mxu0
        %v1630 = vadd.f32 0.0, %v1629
        %v1631 = vpop.f32.mrb[0].mxu0
        %1632 = vdwg.mxu0
        %v1633 = vadd.f32 %v1394, %v1630
        %v1634 = vld [vmem:[%s560] sm:$0x1]
        %v1636 = vlaneseq
        %v1637 = vshrl.u32 %v1636, 7
        %v1638 = vsub.s32 0, %v1637
        %v1639 = vrot.slane %v1634, %v1638
        %v1641 = vadd.f32 %v1633, %v1639
        %v1642 = vadd.f32 %v1641, %v574
        %v1643 = vsel %vm600, %v1642, 0.0
        %1644 = vadd.xlane.f32.xlu0 %v1643
        %v1645 = vpop.xlane.xlu0 %1644
        %v1646 = vmul.f32 %v1645, 0.03125
        %v1647 = vmul.f32 %v1642, %v1642
        %v1648 = vsel %vm600, %v1647, 0.0
        %1649 = vadd.xlane.f32.xlu0 %v1648
        %v1650 = vpop.xlane.xlu0 %1649
        %v1651 = vmul.f32 %v1650, 0.03125
        %v1652 = vmul.f32 %v1646, %v1646
        %v1653 = vsub.f32 %v1651, %v1652
        %v1654 = vmax.f32 %v1653, 0.0
        %v1655 = vsub.f32 %v1642, %v1646
        %v1656 = vadd.f32 %v1654, 1e-12
        %v1657 = vrsqrt.pop %v1656
        %v1658 = vmul.f32 %v1655, %v1657
        %v1659 = vld [vmem:[%s563] sm:$0x1]
        %v1661 = vlaneseq
        %v1662 = vshrl.u32 %v1661, 7
        %v1663 = vsub.s32 0, %v1662
        %v1664 = vrot.slane %v1659, %v1663
        %v1666 = vmul.f32 %v1658, %v1664
        %v1667 = vld [vmem:[%s566] sm:$0x1]
        %v1669 = vlaneseq
        %v1670 = vshrl.u32 %v1669, 7
        %v1671 = vsub.s32 0, %v1670
        %v1672 = vrot.slane %v1667, %v1671
        %v1674 = vadd.f32 %v1666, %v1672
        %1675 = vst.msk [vmem:[#allocation2] sm:$0xff] %vm600, %v1674
        %p1676 = scmp.eq.s32.totalorder %s35, 2
        // Predicated region
        $region77: #{tpu_custom_call.1} parent=59 // pred_check
          %p1677 = pneg %p1676
        $region78: #{tpu_custom_call.1} parent=59 // pred_check_branch
          %1679 = sbr.rel (%p1677) target = $region80
        $region79: #{tpu_custom_call.1} parent=59 // pred_region
          %v1680 = vld [vmem:[%s457] sm:$0xff]
          %v1681 = vsub.f32 %v1674, %v1680
          %v1682 = vmul.f32 %v1681, %v580
          %v1683 = vmul.f32 %v1682, %v1682
          %v1684 = vsel %vm600, %v1683, 0.0
          %v1685 = vrot.slane %v1684, 4
          %v1686 = vadd.f32 %v1684, %v1685
          %v1687 = vrot.slane %v1686, 2
          %v1688 = vadd.f32 %v1686, %v1687
          %v1689 = vrot.slane %v1688, 1
          %v1690 = vadd.f32 %v1688, %v1689
          %vm1691 = vcmask 253952
          %1692 = vst.msk [vmem:[%s543] sm:$0x1] %vm1691, %v1690
        $region80: #{tpu_custom_call.1} parent=59 // pred_fallthru
          _
        %s1693 = sand.u32 %s310, 1
        %s1694 = scalar_lea.sflag [#allocation5], %s1693
        %s1695 = sand.u32 %s310, 1
        %s1696 = scalar_lea.vmem [#allocation9], %s1695
        // Predicated region
        $region81: #{tpu_custom_call.1} parent=59 // pred_check
          %p1697 = pneg %p320
        $region82: #{tpu_custom_call.1} parent=59 // pred_check_branch
          %1699 = sbr.rel (%p1697) target = $region84
        $region83: #{tpu_custom_call.1} parent=59 // pred_region
          %s1701 = ssub.s32 16, 16
          %1702 = vsyncadd %s1694, %s1701
          %s1703 = smul.addr %s34, 16
          %s1704 = scalar_lea.hbm %s10, %s1703
          %s1706 = sshll.u32 %s1696, 4
          %s1707 = int_to_ptr.vmem [resolvable:$true] %s1706
          %1709 = dma.vmem_to_hbm [thread:$0]  %s1707, 16, %s1704, %s1694
        $region84: #{tpu_custom_call.1} parent=59 // pred_fallthru
          _
      $region60: #{tpu_custom_call.1} parent=5 // pred_fallthru
        _
      %p1710 = scmp.le.s32.totalorder 2, %s25
      // Predicated region
      $region85: #{tpu_custom_call.1} parent=5 // pred_check
        %p1711 = pneg %p1710
      $region86: #{tpu_custom_call.1} parent=5 // pred_check_branch
        %1713 = sbr.rel (%p1711) target = $region88
      $region87: #{tpu_custom_call.1} parent=5 // pred_region
        %s1714 = ssub.s32 %s25, 2
        // Predicated region
        $region89: #{tpu_custom_call.1} parent=87 // pred_check
          %p1715 = pneg %p326
        $region90: #{tpu_custom_call.1} parent=87 // pred_check_branch
          %1717 = sbr.rel (%p1715) target = $region92
        $region91: #{tpu_custom_call.1} parent=87 // pred_region
          %s1718 = sand.u32 %s311, 1
          %s1719 = scalar_lea.sflag [#allocation5], %s1718
          %s1720 = sand.u32 %s311, 1
          %s1721 = scalar_lea.vmem [#allocation9], %s1720
          %1722 = dma.done %s1719, 16
        $region92: #{tpu_custom_call.1} parent=87 // pred_fallthru
          _
      $region88: #{tpu_custom_call.1} parent=5 // pred_fallthru
        _
    $region6: #{tpu_custom_call.1} parent=1 // loop_footer
      %s29 = sadd.s32 1, %s25
    $region7: #{tpu_custom_call.1} parent=1 // loop_footer_branch
      %24 = sbr.rel target = $region3
    $region8: #{tpu_custom_call.1} parent=1 // loop_exit
      _
    %1723 = vsyncpa [#allocation4], 1
    %s1724 = scalar_lea.sflag [#allocation4], 1
    %1725 = vsyncpa %s1724, 1
    %1726 = vsyncpa [#allocation7], 1
    %s1727 = scalar_lea.sflag [#allocation7], 1
    %1728 = vsyncpa %s1727, 1
    %1729 = vsyncpa [#allocation5], 1
    %s1730 = scalar_lea.sflag [#allocation5], 1
    %1731 = vsyncpa %s1730, 1

</llo_original>
